<compile_context>
chip_gen: v7x
topology: tpu7x:2x2x1
jax: 0.10.0
libtpu: 0.0.40
codegen_flags: <defaults>
</compile_context>

<pallas_src>
import functools

import jax
import jax.numpy as jnp
from jax.experimental import pallas as pl
from jax.experimental.pallas import tpu as pltpu

HIDDEN_SIZE = 5
INPUT_SIZE = 5


def gru_kernel(*refs, T, B, H, I, has_h0):
    # refs (has_h0=False): x_ref (B*T, I), w_ref, b_ref, out_ref (B, 2)
    # refs (has_h0=True):  x_ref, h0_ref (B, H), w_ref, b_ref, out_ref
    # w_ref: (max(I,H), 6H+2)  columns = [ Wi_r|z|n  |  Wh_r|z|n  |  head_price|head_vol ]
    # b_ref: (1, 4H+2)         columns = [ bir+bhr | biz+bhz | bin | bhn | b_price|b_vol ]
    if has_h0:
        x_ref, h0_ref, w_ref, b_ref, out_ref = refs
    else:
        x_ref, w_ref, b_ref, out_ref = refs
        h0_ref = None

    W = w_ref[...]
    b = b_ref[...]
    wi = W[0:I, 0:3 * H]                  # (I, 3H), cols [r|z|n]
    wh = W[0:H, 3 * H:6 * H]              # (H, 3H), cols [r|z|n]
    w_head = W[0:H, 6 * H:6 * H + 2]      # (H, 2)   [price | volume]
    bi = b[:, 0:3 * H]                    # (1, 3H)  [bir+bhr | biz+bhz | bin]
    bhn = b[:, 3 * H:4 * H]               # (1, H)   hidden n-gate bias (r multiplies it)
    b_head = b[:, 4 * H:4 * H + 2]        # (1, 2)

    # Hoisted input projection: ONE MXU matmul for the whole sequence, kept in vregs.
    gi_all = jnp.dot(x_ref[...], wi, preferred_element_type=jnp.float32) + bi  # (B*T, 3H)
    gi_all = gi_all.reshape(B, T, 3 * H)  # layout no-op: row order is b*T + t

    h = h0_ref[...] if has_h0 else jnp.zeros((B, H), jnp.float32)   # (B, H)

    # Recurrence: statically unrolled (T is a small compile-time constant) so the LLO
    # scheduler can overlap EUP sigmoid/tanh and MXU work across adjacent steps.
    for t in range(T):
        gi = gi_all[:, t, :]                                         # (B, 3H) static slice
        gh = jnp.dot(h, wh, preferred_element_type=jnp.float32)      # single fused hidden dot
        r = jax.nn.sigmoid(gi[:, 0:H] + gh[:, 0:H])
        z = jax.nn.sigmoid(gi[:, H:2 * H] + gh[:, H:2 * H])
        n = jnp.tanh(gi[:, 2 * H:3 * H] + r * (gh[:, 2 * H:3 * H] + bhn))
        h = (1.0 - z) * n + z * h

    # Fused 1x1-conv heads on the last hidden state: (B, H) @ (H, 2) + bias.
    out_ref[...] = jnp.dot(h, w_head, preferred_element_type=jnp.float32) + b_head


def init_params(key):
    """Deterministic init mirroring PyTorch defaults (uniform(-1/sqrt(H), 1/sqrt(H)))."""
    H, I = HIDDEN_SIZE, INPUT_SIZE
    k_gru = 1.0 / jnp.sqrt(jnp.float32(H))
    k_conv = 1.0 / jnp.sqrt(jnp.float32(H))  # fan_in = H * 1 * 1
    keys = jax.random.split(key, 10)
    u = lambda k, shape, s: jax.random.uniform(k, shape, jnp.float32, -s, s)
    params = dict(
        weight_ih=u(keys[0], (3 * H, I), k_gru),   # rows ordered [r, z, n]
        weight_hh=u(keys[1], (3 * H, H), k_gru),
        bias_ih=u(keys[2], (3 * H,), k_gru),
        bias_hh=u(keys[3], (3 * H,), k_gru),
        w_price=u(keys[4], (1, H, 1, 1), k_conv),
        b_price=u(keys[5], (1,), k_conv),
        w_volume=u(keys[6], (1, H, 1, 1), k_conv),
        b_volume=u(keys[7], (1,), k_conv),
    )
    return params


def gru_model_forward(x, params, h0=None):
    """x: (B, T, I) float32, batch-first like PyTorch. Returns (price (B,1), volume (B,1))."""
    B, T, I = x.shape
    H = HIDDEN_SIZE

    w_ih = params["weight_ih"].astype(jnp.float32)    # (3H, I)
    w_hh = params["weight_hh"].astype(jnp.float32)    # (3H, H)
    b_ih = params["bias_ih"].astype(jnp.float32)
    b_hh = params["bias_hh"].astype(jnp.float32)

    # --- Fused weight slab: one operand instead of four tiny DMAs. ---
    R = max(I, H)
    W = jnp.zeros((R, 6 * H + 2), jnp.float32)
    W = W.at[0:I, 0:3 * H].set(w_ih.T)                              # input weights  [r|z|n]
    W = W.at[0:H, 3 * H:6 * H].set(w_hh.T)                          # hidden weights [r|z|n]
    W = W.at[0:H, 6 * H].set(params["w_price"].reshape(H).astype(jnp.float32))
    W = W.at[0:H, 6 * H + 1].set(params["w_volume"].reshape(H).astype(jnp.float32))

    # --- Fused bias slab. r/z biases pre-summed (input + hidden); bhn kept separate
    #     because the reset gate multiplies it inside tanh. ---
    bvec = jnp.concatenate([
        b_ih[0:2 * H] + b_hh[0:2 * H],       # r, z gates fused
        b_ih[2 * H:3 * H],                   # bin
        b_hh[2 * H:3 * H],                   # bhn
        params["b_price"].reshape(1).astype(jnp.float32),
        params["b_volume"].reshape(1).astype(jnp.float32),
    ]).reshape(1, 4 * H + 2)

    # Free reshape (no transpose, no HBM round trip): row = b*T + t.
    x_flat = x.reshape(B * T, I).astype(jnp.float32)

    has_h0 = h0 is not None
    if has_h0:
        args = (x_flat, h0.astype(jnp.float32), W, bvec)
    else:
        args = (x_flat, W, bvec)

    vmem = pl.BlockSpec(memory_space=pltpu.MemorySpace.VMEM)
    fn = pl.pallas_call(
        functools.partial(gru_kernel, T=T, B=B, H=H, I=I, has_h0=has_h0),
        out_shape=jax.ShapeDtypeStruct((B, 2), jnp.float32),
        in_specs=[vmem] * len(args),
        out_specs=vmem,
    )
    out = fn(*args)
    price = out[:, 0:1]
    volume = out[:, 1:2]
    return price, volume


def reference_forward(x, params, h0=None):
    """Pure-JAX reference matching PyTorch GRU semantics."""
    B, T, I = x.shape
    H = HIDDEN_SIZE
    if h0 is None:
        h0 = jnp.zeros((B, H), jnp.float32)
    w_ih = params["weight_ih"]; w_hh = params["weight_hh"]
    b_ih = params["bias_ih"]; b_hh = params["bias_hh"]
    h = h0
    for t in range(T):
        x_t = x[:, t, :]
        gi = x_t @ w_ih.T + b_ih
        gh = h @ w_hh.T + b_hh
        r = jax.nn.sigmoid(gi[:, 0:H] + gh[:, 0:H])
        z = jax.nn.sigmoid(gi[:, H:2 * H] + gh[:, H:2 * H])
        n = jnp.tanh(gi[:, 2 * H:] + r * gh[:, 2 * H:])
        h = (1.0 - z) * n + z * h
    price = h @ params["w_price"].reshape(1, H).T + params["b_price"].reshape(1, 1)
    volume = h @ params["w_volume"].reshape(1, H).T + params["b_volume"].reshape(1, 1)
    return price, volume


if __name__ == "__main__":
    key = jax.random.PRNGKey(0)
    k_param, k_x = jax.random.split(key)
    params = init_params(k_param)

    B, T = 2, 8
    x = jax.random.normal(k_x, (B, T, INPUT_SIZE), jnp.float32)

    price, volume = gru_model_forward(x, params)          # default h0=None path
    jax.block_until_ready((price, volume))

    price_ref, volume_ref = reference_forward(x, params)
    assert jnp.allclose(price, price_ref, atol=1e-5), "price mismatch vs reference"
    assert jnp.allclose(volume, volume_ref, atol=1e-5), "volume mismatch vs reference"

    print("KERNEL_OK")
</pallas_src>

<mosaic_0001>
module attributes {stable_mosaic.version = 11 : i64} {
  func.func @gru_kernel(%arg0: memref<16x5xf32, #tpu.memory_space<vmem>>, %arg1: memref<5x32xf32, #tpu.memory_space<vmem>>, %arg2: memref<1x22xf32, #tpu.memory_space<vmem>>, %arg3: memref<2x2xf32, #tpu.memory_space<vmem>>) attributes {dimension_semantics = [], scalar_prefetch = 0 : i64, scratch_operands = 0 : i64, tpu.core_type = #tpu.core_type<tc>} {
    %c0 = arith.constant 0 : index
    %c0_0 = arith.constant 0 : index
    %0 = vector.load %arg1[%c0, %c0_0] : memref<5x32xf32, #tpu.memory_space<vmem>>, vector<5x32xf32>
    %c0_1 = arith.constant 0 : index
    %c0_2 = arith.constant 0 : index
    %1 = vector.load %arg2[%c0_1, %c0_2] : memref<1x22xf32, #tpu.memory_space<vmem>>, vector<1x22xf32>
    %2 = vector.extract_strided_slice %0 {offsets = [0, 0], sizes = [5, 15], strides = [1, 1]} : vector<5x32xf32> to vector<5x15xf32>
    %3 = vector.extract_strided_slice %0 {offsets = [0, 15], sizes = [5, 15], strides = [1, 1]} : vector<5x32xf32> to vector<5x15xf32>
    %4 = vector.extract_strided_slice %0 {offsets = [0, 30], sizes = [5, 2], strides = [1, 1]} : vector<5x32xf32> to vector<5x2xf32>
    %5 = vector.extract_strided_slice %1 {offsets = [0, 0], sizes = [1, 15], strides = [1, 1]} : vector<1x22xf32> to vector<1x15xf32>
    %6 = vector.extract_strided_slice %1 {offsets = [0, 15], sizes = [1, 5], strides = [1, 1]} : vector<1x22xf32> to vector<1x5xf32>
    %7 = vector.extract_strided_slice %1 {offsets = [0, 20], sizes = [1, 2], strides = [1, 1]} : vector<1x22xf32> to vector<1x2xf32>
    %c0_3 = arith.constant 0 : index
    %c0_4 = arith.constant 0 : index
    %8 = vector.load %arg0[%c0_3, %c0_4] : memref<16x5xf32, #tpu.memory_space<vmem>>, vector<16x5xf32>
    %cst = arith.constant dense<0.000000e+00> : vector<16x15xf32>
    %9 = tpu.matmul %8, %2, %cst {dimension_numbers = #tpu.dot_dimension_numbers<[1], [0], [0], [1], [0, 0, 1, 1], [], []>} : vector<16x5xf32>, vector<5x15xf32>, vector<16x15xf32> -> vector<16x15xf32>
    %10 = vector.broadcast %5 : vector<1x15xf32> to vector<16x15xf32>
    %11 = arith.addf %9, %10 : vector<16x15xf32>
    %12 = vector.shape_cast %11 : vector<16x15xf32> to vector<2x8x15xf32>
    %cst_5 = arith.constant 0.000000e+00 : f32
    %13 = vector.broadcast %cst_5 : f32 to vector<2x5xf32>
    %14 = vector.extract_strided_slice %12 {offsets = [0, 0, 0], sizes = [2, 1, 15], strides = [1, 1, 1]} : vector<2x8x15xf32> to vector<2x1x15xf32>
    %15 = vector.shape_cast %14 : vector<2x1x15xf32> to vector<2x15xf32>
    %cst_6 = arith.constant dense<0.000000e+00> : vector<2x15xf32>
    %16 = tpu.matmul %13, %3, %cst_6 {dimension_numbers = #tpu.dot_dimension_numbers<[1], [0], [0], [1], [0, 0, 1, 1], [], []>} : vector<2x5xf32>, vector<5x15xf32>, vector<2x15xf32> -> vector<2x15xf32>
    %17 = vector.extract_strided_slice %15 {offsets = [0, 0], sizes = [2, 5], strides = [1, 1]} : vector<2x15xf32> to vector<2x5xf32>
    %18 = vector.extract_strided_slice %16 {offsets = [0, 0], sizes = [2, 5], strides = [1, 1]} : vector<2x15xf32> to vector<2x5xf32>
    %19 = arith.addf %17, %18 : vector<2x5xf32>
    %20 = arith.negf %19 : vector<2x5xf32>
    %21 = math.exp %20 : vector<2x5xf32>
    %cst_7 = arith.constant 1.000000e+00 : f32
    %22 = vector.broadcast %cst_7 : f32 to vector<2x5xf32>
    %23 = arith.addf %22, %21 : vector<2x5xf32>
    %24 = arith.divf %22, %23 : vector<2x5xf32>
    %25 = vector.extract_strided_slice %15 {offsets = [0, 5], sizes = [2, 5], strides = [1, 1]} : vector<2x15xf32> to vector<2x5xf32>
    %26 = vector.extract_strided_slice %16 {offsets = [0, 5], sizes = [2, 5], strides = [1, 1]} : vector<2x15xf32> to vector<2x5xf32>
    %27 = arith.addf %25, %26 : vector<2x5xf32>
    %28 = arith.negf %27 : vector<2x5xf32>
    %29 = math.exp %28 : vector<2x5xf32>
    %cst_8 = arith.constant 1.000000e+00 : f32
    %30 = vector.broadcast %cst_8 : f32 to vector<2x5xf32>
    %31 = arith.addf %30, %29 : vector<2x5xf32>
    %32 = arith.divf %30, %31 : vector<2x5xf32>
    %33 = vector.extract_strided_slice %15 {offsets = [0, 10], sizes = [2, 5], strides = [1, 1]} : vector<2x15xf32> to vector<2x5xf32>
    %34 = vector.extract_strided_slice %16 {offsets = [0, 10], sizes = [2, 5], strides = [1, 1]} : vector<2x15xf32> to vector<2x5xf32>
    %35 = vector.broadcast %6 : vector<1x5xf32> to vector<2x5xf32>
    %36 = arith.addf %34, %35 : vector<2x5xf32>
    %37 = arith.mulf %24, %36 : vector<2x5xf32>
    %38 = arith.addf %33, %37 : vector<2x5xf32>
    %39 = math.tanh %38 : vector<2x5xf32>
    %cst_9 = arith.constant 1.000000e+00 : f32
    %40 = vector.broadcast %cst_9 : f32 to vector<2x5xf32>
    %41 = arith.subf %40, %32 : vector<2x5xf32>
    %42 = arith.mulf %41, %39 : vector<2x5xf32>
    %43 = arith.mulf %32, %13 : vector<2x5xf32>
    %44 = arith.addf %42, %43 : vector<2x5xf32>
    %45 = vector.extract_strided_slice %12 {offsets = [0, 1, 0], sizes = [2, 1, 15], strides = [1, 1, 1]} : vector<2x8x15xf32> to vector<2x1x15xf32>
    %46 = vector.shape_cast %45 : vector<2x1x15xf32> to vector<2x15xf32>
    %cst_10 = arith.constant dense<0.000000e+00> : vector<2x15xf32>
    %47 = tpu.matmul %44, %3, %cst_10 {dimension_numbers = #tpu.dot_dimension_numbers<[1], [0], [0], [1], [0, 0, 1, 1], [], []>} : vector<2x5xf32>, vector<5x15xf32>, vector<2x15xf32> -> vector<2x15xf32>
    %48 = vector.extract_strided_slice %46 {offsets = [0, 0], sizes = [2, 5], strides = [1, 1]} : vector<2x15xf32> to vector<2x5xf32>
    %49 = vector.extract_strided_slice %47 {offsets = [0, 0], sizes = [2, 5], strides = [1, 1]} : vector<2x15xf32> to vector<2x5xf32>
    %50 = arith.addf %48, %49 : vector<2x5xf32>
    %51 = arith.negf %50 : vector<2x5xf32>
    %52 = math.exp %51 : vector<2x5xf32>
    %cst_11 = arith.constant 1.000000e+00 : f32
    %53 = vector.broadcast %cst_11 : f32 to vector<2x5xf32>
    %54 = arith.addf %53, %52 : vector<2x5xf32>
    %55 = arith.divf %53, %54 : vector<2x5xf32>
    %56 = vector.extract_strided_slice %46 {offsets = [0, 5], sizes = [2, 5], strides = [1, 1]} : vector<2x15xf32> to vector<2x5xf32>
    %57 = vector.extract_strided_slice %47 {offsets = [0, 5], sizes = [2, 5], strides = [1, 1]} : vector<2x15xf32> to vector<2x5xf32>
    %58 = arith.addf %56, %57 : vector<2x5xf32>
    %59 = arith.negf %58 : vector<2x5xf32>
    %60 = math.exp %59 : vector<2x5xf32>
    %cst_12 = arith.constant 1.000000e+00 : f32
    %61 = vector.broadcast %cst_12 : f32 to vector<2x5xf32>
    %62 = arith.addf %61, %60 : vector<2x5xf32>
    %63 = arith.divf %61, %62 : vector<2x5xf32>
    %64 = vector.extract_strided_slice %46 {offsets = [0, 10], sizes = [2, 5], strides = [1, 1]} : vector<2x15xf32> to vector<2x5xf32>
    %65 = vector.extract_strided_slice %47 {offsets = [0, 10], sizes = [2, 5], strides = [1, 1]} : vector<2x15xf32> to vector<2x5xf32>
    %66 = vector.broadcast %6 : vector<1x5xf32> to vector<2x5xf32>
    %67 = arith.addf %65, %66 : vector<2x5xf32>
    %68 = arith.mulf %55, %67 : vector<2x5xf32>
    %69 = arith.addf %64, %68 : vector<2x5xf32>
    %70 = math.tanh %69 : vector<2x5xf32>
    %cst_13 = arith.constant 1.000000e+00 : f32
    %71 = vector.broadcast %cst_13 : f32 to vector<2x5xf32>
    %72 = arith.subf %71, %63 : vector<2x5xf32>
    %73 = arith.mulf %72, %70 : vector<2x5xf32>
    %74 = arith.mulf %63, %44 : vector<2x5xf32>
    %75 = arith.addf %73, %74 : vector<2x5xf32>
    %76 = vector.extract_strided_slice %12 {offsets = [0, 2, 0], sizes = [2, 1, 15], strides = [1, 1, 1]} : vector<2x8x15xf32> to vector<2x1x15xf32>
    %77 = vector.shape_cast %76 : vector<2x1x15xf32> to vector<2x15xf32>
    %cst_14 = arith.constant dense<0.000000e+00> : vector<2x15xf32>
    %78 = tpu.matmul %75, %3, %cst_14 {dimension_numbers = #tpu.dot_dimension_numbers<[1], [0], [0], [1], [0, 0, 1, 1], [], []>} : vector<2x5xf32>, vector<5x15xf32>, vector<2x15xf32> -> vector<2x15xf32>
    %79 = vector.extract_strided_slice %77 {offsets = [0, 0], sizes = [2, 5], strides = [1, 1]} : vector<2x15xf32> to vector<2x5xf32>
    %80 = vector.extract_strided_slice %78 {offsets = [0, 0], sizes = [2, 5], strides = [1, 1]} : vector<2x15xf32> to vector<2x5xf32>
    %81 = arith.addf %79, %80 : vector<2x5xf32>
    %82 = arith.negf %81 : vector<2x5xf32>
    %83 = math.exp %82 : vector<2x5xf32>
    %cst_15 = arith.constant 1.000000e+00 : f32
    %84 = vector.broadcast %cst_15 : f32 to vector<2x5xf32>
    %85 = arith.addf %84, %83 : vector<2x5xf32>
    %86 = arith.divf %84, %85 : vector<2x5xf32>
    %87 = vector.extract_strided_slice %77 {offsets = [0, 5], sizes = [2, 5], strides = [1, 1]} : vector<2x15xf32> to vector<2x5xf32>
    %88 = vector.extract_strided_slice %78 {offsets = [0, 5], sizes = [2, 5], strides = [1, 1]} : vector<2x15xf32> to vector<2x5xf32>
    %89 = arith.addf %87, %88 : vector<2x5xf32>
    %90 = arith.negf %89 : vector<2x5xf32>
    %91 = math.exp %90 : vector<2x5xf32>
    %cst_16 = arith.constant 1.000000e+00 : f32
    %92 = vector.broadcast %cst_16 : f32 to vector<2x5xf32>
    %93 = arith.addf %92, %91 : vector<2x5xf32>
    %94 = arith.divf %92, %93 : vector<2x5xf32>
    %95 = vector.extract_strided_slice %77 {offsets = [0, 10], sizes = [2, 5], strides = [1, 1]} : vector<2x15xf32> to vector<2x5xf32>
    %96 = vector.extract_strided_slice %78 {offsets = [0, 10], sizes = [2, 5], strides = [1, 1]} : vector<2x15xf32> to vector<2x5xf32>
    %97 = vector.broadcast %6 : vector<1x5xf32> to vector<2x5xf32>
    %98 = arith.addf %96, %97 : vector<2x5xf32>
    %99 = arith.mulf %86, %98 : vector<2x5xf32>
    %100 = arith.addf %95, %99 : vector<2x5xf32>
    %101 = math.tanh %100 : vector<2x5xf32>
    %cst_17 = arith.constant 1.000000e+00 : f32
    %102 = vector.broadcast %cst_17 : f32 to vector<2x5xf32>
    %103 = arith.subf %102, %94 : vector<2x5xf32>
    %104 = arith.mulf %103, %101 : vector<2x5xf32>
    %105 = arith.mulf %94, %75 : vector<2x5xf32>
    %106 = arith.addf %104, %105 : vector<2x5xf32>
    %107 = vector.extract_strided_slice %12 {offsets = [0, 3, 0], sizes = [2, 1, 15], strides = [1, 1, 1]} : vector<2x8x15xf32> to vector<2x1x15xf32>
    %108 = vector.shape_cast %107 : vector<2x1x15xf32> to vector<2x15xf32>
    %cst_18 = arith.constant dense<0.000000e+00> : vector<2x15xf32>
    %109 = tpu.matmul %106, %3, %cst_18 {dimension_numbers = #tpu.dot_dimension_numbers<[1], [0], [0], [1], [0, 0, 1, 1], [], []>} : vector<2x5xf32>, vector<5x15xf32>, vector<2x15xf32> -> vector<2x15xf32>
    %110 = vector.extract_strided_slice %108 {offsets = [0, 0], sizes = [2, 5], strides = [1, 1]} : vector<2x15xf32> to vector<2x5xf32>
    %111 = vector.extract_strided_slice %109 {offsets = [0, 0], sizes = [2, 5], strides = [1, 1]} : vector<2x15xf32> to vector<2x5xf32>
    %112 = arith.addf %110, %111 : vector<2x5xf32>
    %113 = arith.negf %112 : vector<2x5xf32>
    %114 = math.exp %113 : vector<2x5xf32>
    %cst_19 = arith.constant 1.000000e+00 : f32
    %115 = vector.broadcast %cst_19 : f32 to vector<2x5xf32>
    %116 = arith.addf %115, %114 : vector<2x5xf32>
    %117 = arith.divf %115, %116 : vector<2x5xf32>
    %118 = vector.extract_strided_slice %108 {offsets = [0, 5], sizes = [2, 5], strides = [1, 1]} : vector<2x15xf32> to vector<2x5xf32>
    %119 = vector.extract_strided_slice %109 {offsets = [0, 5], sizes = [2, 5], strides = [1, 1]} : vector<2x15xf32> to vector<2x5xf32>
    %120 = arith.addf %118, %119 : vector<2x5xf32>
    %121 = arith.negf %120 : vector<2x5xf32>
    %122 = math.exp %121 : vector<2x5xf32>
    %cst_20 = arith.constant 1.000000e+00 : f32
    %123 = vector.broadcast %cst_20 : f32 to vector<2x5xf32>
    %124 = arith.addf %123, %122 : vector<2x5xf32>
    %125 = arith.divf %123, %124 : vector<2x5xf32>
    %126 = vector.extract_strided_slice %108 {offsets = [0, 10], sizes = [2, 5], strides = [1, 1]} : vector<2x15xf32> to vector<2x5xf32>
    %127 = vector.extract_strided_slice %109 {offsets = [0, 10], sizes = [2, 5], strides = [1, 1]} : vector<2x15xf32> to vector<2x5xf32>
    %128 = vector.broadcast %6 : vector<1x5xf32> to vector<2x5xf32>
    %129 = arith.addf %127, %128 : vector<2x5xf32>
    %130 = arith.mulf %117, %129 : vector<2x5xf32>
    %131 = arith.addf %126, %130 : vector<2x5xf32>
    %132 = math.tanh %131 : vector<2x5xf32>
    %cst_21 = arith.constant 1.000000e+00 : f32
    %133 = vector.broadcast %cst_21 : f32 to vector<2x5xf32>
    %134 = arith.subf %133, %125 : vector<2x5xf32>
    %135 = arith.mulf %134, %132 : vector<2x5xf32>
    %136 = arith.mulf %125, %106 : vector<2x5xf32>
    %137 = arith.addf %135, %136 : vector<2x5xf32>
    %138 = vector.extract_strided_slice %12 {offsets = [0, 4, 0], sizes = [2, 1, 15], strides = [1, 1, 1]} : vector<2x8x15xf32> to vector<2x1x15xf32>
    %139 = vector.shape_cast %138 : vector<2x1x15xf32> to vector<2x15xf32>
    %cst_22 = arith.constant dense<0.000000e+00> : vector<2x15xf32>
    %140 = tpu.matmul %137, %3, %cst_22 {dimension_numbers = #tpu.dot_dimension_numbers<[1], [0], [0], [1], [0, 0, 1, 1], [], []>} : vector<2x5xf32>, vector<5x15xf32>, vector<2x15xf32> -> vector<2x15xf32>
    %141 = vector.extract_strided_slice %139 {offsets = [0, 0], sizes = [2, 5], strides = [1, 1]} : vector<2x15xf32> to vector<2x5xf32>
    %142 = vector.extract_strided_slice %140 {offsets = [0, 0], sizes = [2, 5], strides = [1, 1]} : vector<2x15xf32> to vector<2x5xf32>
    %143 = arith.addf %141, %142 : vector<2x5xf32>
    %144 = arith.negf %143 : vector<2x5xf32>
    %145 = math.exp %144 : vector<2x5xf32>
    %cst_23 = arith.constant 1.000000e+00 : f32
    %146 = vector.broadcast %cst_23 : f32 to vector<2x5xf32>
    %147 = arith.addf %146, %145 : vector<2x5xf32>
    %148 = arith.divf %146, %147 : vector<2x5xf32>
    %149 = vector.extract_strided_slice %139 {offsets = [0, 5], sizes = [2, 5], strides = [1, 1]} : vector<2x15xf32> to vector<2x5xf32>
    %150 = vector.extract_strided_slice %140 {offsets = [0, 5], sizes = [2, 5], strides = [1, 1]} : vector<2x15xf32> to vector<2x5xf32>
    %151 = arith.addf %149, %150 : vector<2x5xf32>
    %152 = arith.negf %151 : vector<2x5xf32>
    %153 = math.exp %152 : vector<2x5xf32>
    %cst_24 = arith.constant 1.000000e+00 : f32
    %154 = vector.broadcast %cst_24 : f32 to vector<2x5xf32>
    %155 = arith.addf %154, %153 : vector<2x5xf32>
    %156 = arith.divf %154, %155 : vector<2x5xf32>
    %157 = vector.extract_strided_slice %139 {offsets = [0, 10], sizes = [2, 5], strides = [1, 1]} : vector<2x15xf32> to vector<2x5xf32>
    %158 = vector.extract_strided_slice %140 {offsets = [0, 10], sizes = [2, 5], strides = [1, 1]} : vector<2x15xf32> to vector<2x5xf32>
    %159 = vector.broadcast %6 : vector<1x5xf32> to vector<2x5xf32>
    %160 = arith.addf %158, %159 : vector<2x5xf32>
    %161 = arith.mulf %148, %160 : vector<2x5xf32>
    %162 = arith.addf %157, %161 : vector<2x5xf32>
    %163 = math.tanh %162 : vector<2x5xf32>
    %cst_25 = arith.constant 1.000000e+00 : f32
    %164 = vector.broadcast %cst_25 : f32 to vector<2x5xf32>
    %165 = arith.subf %164, %156 : vector<2x5xf32>
    %166 = arith.mulf %165, %163 : vector<2x5xf32>
    %167 = arith.mulf %156, %137 : vector<2x5xf32>
    %168 = arith.addf %166, %167 : vector<2x5xf32>
    %169 = vector.extract_strided_slice %12 {offsets = [0, 5, 0], sizes = [2, 1, 15], strides = [1, 1, 1]} : vector<2x8x15xf32> to vector<2x1x15xf32>
    %170 = vector.shape_cast %169 : vector<2x1x15xf32> to vector<2x15xf32>
    %cst_26 = arith.constant dense<0.000000e+00> : vector<2x15xf32>
    %171 = tpu.matmul %168, %3, %cst_26 {dimension_numbers = #tpu.dot_dimension_numbers<[1], [0], [0], [1], [0, 0, 1, 1], [], []>} : vector<2x5xf32>, vector<5x15xf32>, vector<2x15xf32> -> vector<2x15xf32>
    %172 = vector.extract_strided_slice %170 {offsets = [0, 0], sizes = [2, 5], strides = [1, 1]} : vector<2x15xf32> to vector<2x5xf32>
    %173 = vector.extract_strided_slice %171 {offsets = [0, 0], sizes = [2, 5], strides = [1, 1]} : vector<2x15xf32> to vector<2x5xf32>
    %174 = arith.addf %172, %173 : vector<2x5xf32>
    %175 = arith.negf %174 : vector<2x5xf32>
    %176 = math.exp %175 : vector<2x5xf32>
    %cst_27 = arith.constant 1.000000e+00 : f32
    %177 = vector.broadcast %cst_27 : f32 to vector<2x5xf32>
    %178 = arith.addf %177, %176 : vector<2x5xf32>
    %179 = arith.divf %177, %178 : vector<2x5xf32>
    %180 = vector.extract_strided_slice %170 {offsets = [0, 5], sizes = [2, 5], strides = [1, 1]} : vector<2x15xf32> to vector<2x5xf32>
    %181 = vector.extract_strided_slice %171 {offsets = [0, 5], sizes = [2, 5], strides = [1, 1]} : vector<2x15xf32> to vector<2x5xf32>
    %182 = arith.addf %180, %181 : vector<2x5xf32>
    %183 = arith.negf %182 : vector<2x5xf32>
    %184 = math.exp %183 : vector<2x5xf32>
    %cst_28 = arith.constant 1.000000e+00 : f32
    %185 = vector.broadcast %cst_28 : f32 to vector<2x5xf32>
    %186 = arith.addf %185, %184 : vector<2x5xf32>
    %187 = arith.divf %185, %186 : vector<2x5xf32>
    %188 = vector.extract_strided_slice %170 {offsets = [0, 10], sizes = [2, 5], strides = [1, 1]} : vector<2x15xf32> to vector<2x5xf32>
    %189 = vector.extract_strided_slice %171 {offsets = [0, 10], sizes = [2, 5], strides = [1, 1]} : vector<2x15xf32> to vector<2x5xf32>
    %190 = vector.broadcast %6 : vector<1x5xf32> to vector<2x5xf32>
    %191 = arith.addf %189, %190 : vector<2x5xf32>
    %192 = arith.mulf %179, %191 : vector<2x5xf32>
    %193 = arith.addf %188, %192 : vector<2x5xf32>
    %194 = math.tanh %193 : vector<2x5xf32>
    %cst_29 = arith.constant 1.000000e+00 : f32
    %195 = vector.broadcast %cst_29 : f32 to vector<2x5xf32>
    %196 = arith.subf %195, %187 : vector<2x5xf32>
    %197 = arith.mulf %196, %194 : vector<2x5xf32>
    %198 = arith.mulf %187, %168 : vector<2x5xf32>
    %199 = arith.addf %197, %198 : vector<2x5xf32>
    %200 = vector.extract_strided_slice %12 {offsets = [0, 6, 0], sizes = [2, 1, 15], strides = [1, 1, 1]} : vector<2x8x15xf32> to vector<2x1x15xf32>
    %201 = vector.shape_cast %200 : vector<2x1x15xf32> to vector<2x15xf32>
    %cst_30 = arith.constant dense<0.000000e+00> : vector<2x15xf32>
    %202 = tpu.matmul %199, %3, %cst_30 {dimension_numbers = #tpu.dot_dimension_numbers<[1], [0], [0], [1], [0, 0, 1, 1], [], []>} : vector<2x5xf32>, vector<5x15xf32>, vector<2x15xf32> -> vector<2x15xf32>
    %203 = vector.extract_strided_slice %201 {offsets = [0, 0], sizes = [2, 5], strides = [1, 1]} : vector<2x15xf32> to vector<2x5xf32>
    %204 = vector.extract_strided_slice %202 {offsets = [0, 0], sizes = [2, 5], strides = [1, 1]} : vector<2x15xf32> to vector<2x5xf32>
    %205 = arith.addf %203, %204 : vector<2x5xf32>
    %206 = arith.negf %205 : vector<2x5xf32>
    %207 = math.exp %206 : vector<2x5xf32>
    %cst_31 = arith.constant 1.000000e+00 : f32
    %208 = vector.broadcast %cst_31 : f32 to vector<2x5xf32>
    %209 = arith.addf %208, %207 : vector<2x5xf32>
    %210 = arith.divf %208, %209 : vector<2x5xf32>
    %211 = vector.extract_strided_slice %201 {offsets = [0, 5], sizes = [2, 5], strides = [1, 1]} : vector<2x15xf32> to vector<2x5xf32>
    %212 = vector.extract_strided_slice %202 {offsets = [0, 5], sizes = [2, 5], strides = [1, 1]} : vector<2x15xf32> to vector<2x5xf32>
    %213 = arith.addf %211, %212 : vector<2x5xf32>
    %214 = arith.negf %213 : vector<2x5xf32>
    %215 = math.exp %214 : vector<2x5xf32>
    %cst_32 = arith.constant 1.000000e+00 : f32
    %216 = vector.broadcast %cst_32 : f32 to vector<2x5xf32>
    %217 = arith.addf %216, %215 : vector<2x5xf32>
    %218 = arith.divf %216, %217 : vector<2x5xf32>
    %219 = vector.extract_strided_slice %201 {offsets = [0, 10], sizes = [2, 5], strides = [1, 1]} : vector<2x15xf32> to vector<2x5xf32>
    %220 = vector.extract_strided_slice %202 {offsets = [0, 10], sizes = [2, 5], strides = [1, 1]} : vector<2x15xf32> to vector<2x5xf32>
    %221 = vector.broadcast %6 : vector<1x5xf32> to vector<2x5xf32>
    %222 = arith.addf %220, %221 : vector<2x5xf32>
    %223 = arith.mulf %210, %222 : vector<2x5xf32>
    %224 = arith.addf %219, %223 : vector<2x5xf32>
    %225 = math.tanh %224 : vector<2x5xf32>
    %cst_33 = arith.constant 1.000000e+00 : f32
    %226 = vector.broadcast %cst_33 : f32 to vector<2x5xf32>
    %227 = arith.subf %226, %218 : vector<2x5xf32>
    %228 = arith.mulf %227, %225 : vector<2x5xf32>
    %229 = arith.mulf %218, %199 : vector<2x5xf32>
    %230 = arith.addf %228, %229 : vector<2x5xf32>
    %231 = vector.extract_strided_slice %12 {offsets = [0, 7, 0], sizes = [2, 1, 15], strides = [1, 1, 1]} : vector<2x8x15xf32> to vector<2x1x15xf32>
    %232 = vector.shape_cast %231 : vector<2x1x15xf32> to vector<2x15xf32>
    %cst_34 = arith.constant dense<0.000000e+00> : vector<2x15xf32>
    %233 = tpu.matmul %230, %3, %cst_34 {dimension_numbers = #tpu.dot_dimension_numbers<[1], [0], [0], [1], [0, 0, 1, 1], [], []>} : vector<2x5xf32>, vector<5x15xf32>, vector<2x15xf32> -> vector<2x15xf32>
    %234 = vector.extract_strided_slice %232 {offsets = [0, 0], sizes = [2, 5], strides = [1, 1]} : vector<2x15xf32> to vector<2x5xf32>
    %235 = vector.extract_strided_slice %233 {offsets = [0, 0], sizes = [2, 5], strides = [1, 1]} : vector<2x15xf32> to vector<2x5xf32>
    %236 = arith.addf %234, %235 : vector<2x5xf32>
    %237 = arith.negf %236 : vector<2x5xf32>
    %238 = math.exp %237 : vector<2x5xf32>
    %cst_35 = arith.constant 1.000000e+00 : f32
    %239 = vector.broadcast %cst_35 : f32 to vector<2x5xf32>
    %240 = arith.addf %239, %238 : vector<2x5xf32>
    %241 = arith.divf %239, %240 : vector<2x5xf32>
    %242 = vector.extract_strided_slice %232 {offsets = [0, 5], sizes = [2, 5], strides = [1, 1]} : vector<2x15xf32> to vector<2x5xf32>
    %243 = vector.extract_strided_slice %233 {offsets = [0, 5], sizes = [2, 5], strides = [1, 1]} : vector<2x15xf32> to vector<2x5xf32>
    %244 = arith.addf %242, %243 : vector<2x5xf32>
    %245 = arith.negf %244 : vector<2x5xf32>
    %246 = math.exp %245 : vector<2x5xf32>
    %cst_36 = arith.constant 1.000000e+00 : f32
    %247 = vector.broadcast %cst_36 : f32 to vector<2x5xf32>
    %248 = arith.addf %247, %246 : vector<2x5xf32>
    %249 = arith.divf %247, %248 : vector<2x5xf32>
    %250 = vector.extract_strided_slice %232 {offsets = [0, 10], sizes = [2, 5], strides = [1, 1]} : vector<2x15xf32> to vector<2x5xf32>
    %251 = vector.extract_strided_slice %233 {offsets = [0, 10], sizes = [2, 5], strides = [1, 1]} : vector<2x15xf32> to vector<2x5xf32>
    %252 = vector.broadcast %6 : vector<1x5xf32> to vector<2x5xf32>
    %253 = arith.addf %251, %252 : vector<2x5xf32>
    %254 = arith.mulf %241, %253 : vector<2x5xf32>
    %255 = arith.addf %250, %254 : vector<2x5xf32>
    %256 = math.tanh %255 : vector<2x5xf32>
    %cst_37 = arith.constant 1.000000e+00 : f32
    %257 = vector.broadcast %cst_37 : f32 to vector<2x5xf32>
    %258 = arith.subf %257, %249 : vector<2x5xf32>
    %259 = arith.mulf %258, %256 : vector<2x5xf32>
    %260 = arith.mulf %249, %230 : vector<2x5xf32>
    %261 = arith.addf %259, %260 : vector<2x5xf32>
    %cst_38 = arith.constant dense<0.000000e+00> : vector<2x2xf32>
    %262 = tpu.matmul %261, %4, %cst_38 {dimension_numbers = #tpu.dot_dimension_numbers<[1], [0], [0], [1], [0, 0, 1, 1], [], []>} : vector<2x5xf32>, vector<5x2xf32>, vector<2x2xf32> -> vector<2x2xf32>
    %263 = vector.broadcast %7 : vector<1x2xf32> to vector<2x2xf32>
    %264 = arith.addf %262, %263 : vector<2x2xf32>
    %c0_39 = arith.constant 0 : index
    %c0_40 = arith.constant 0 : index
    %265 = vector.load %arg3[%c0_39, %c0_40] : memref<2x2xf32, #tpu.memory_space<vmem>>, vector<2x2xf32>
    tpu.vector_store %arg3[%c0_39, %c0_40], %264 {strides = array<i32>} : memref<2x2xf32, #tpu.memory_space<vmem>>, vector<2x2xf32>,
    return
  }
}

</mosaic_0001>

<llo_original>
// kernel: tpu_custom_call.1
$region0: #{tpu_custom_call.1}
  #allocation0 [shape = 'u32[]', space=smem, size = 0x4, offset = 0x4, fixed_abs, tag = 'smem constant byte address 0x4 - core index']
  #allocation1 [shape = 'u32[144,128]{1,0:T(1,128)}', space=vmem, size = 0x12000, scoped, tag = 'internal scratch']
  %s0 = inlined_call_operand.vmem [shape: f32[16,5], index: 0, kind: input, shape index: {}]
  %s1 = inlined_call_operand.vmem [shape: f32[5,32], index: 1, kind: input, shape index: {}]
  %s2 = inlined_call_operand.vmem [shape: f32[1,22], index: 2, kind: input, shape index: {}]
  %s3 = inlined_call_operand.hbm [shape: f32[2,2], index: 3, kind: output, shape index: {}]
  %s4 = sld [smem:[#allocation0]]
  $region22: #{tpu_custom_call.1} parent=0
    _
  %s6 = ssub.s32 1, %s4
  %s7 = scalar_select 0, %s6, %s4
  $region1: #{tpu_custom_call.1} parent=0
    #allocation2 [shape = 'u8[1024]{0}', space=vmem, size = 0x400, scoped, tag = 'output window, operand 0, single buffered']
    #allocation3 [shape = 's32[1]{0}', space=sflag, size = 0x4, scoped, tag = 'scoped memory for tpu_custom_call.1']
    %8 = vsyncpa [#allocation3], 0
    // Predicated region
    $region2: #{tpu_custom_call.1} parent=1 // pred_check
      _
    $region3: #{tpu_custom_call.1} parent=1 // pred_check_branch
      %10 = sbr.rel (0) target = $region5
    $region4: #{tpu_custom_call.1} parent=1 // pred_region
      _
    $region5: #{tpu_custom_call.1} parent=1 // pred_fallthru
      _
    // Predicated region
    $region6: #{tpu_custom_call.1} parent=1 // pred_check
      _
    $region7: #{tpu_custom_call.1} parent=1 // pred_check_branch
      %12 = sbr.rel (0) target = $region9
    $region8: #{tpu_custom_call.1} parent=1 // pred_region
      _
    $region9: #{tpu_custom_call.1} parent=1 // pred_fallthru
      _
    // Predicated region
    $region10: #{tpu_custom_call.1} parent=1 // pred_check
      _
    $region11: #{tpu_custom_call.1} parent=1 // pred_check_branch
      %14 = sbr.rel (0) target = $region13
    $region12: #{tpu_custom_call.1} parent=1 // pred_region
      _
    $region13: #{tpu_custom_call.1} parent=1 // pred_fallthru
      _
    %v15 = vld [vmem:[%s1] sm:$0x1f]
    %v16 = vld [vmem:[%s2] sm:$0x1]
    %v17 = vld [vmem:[%s0] sm:$0xff]
    %v18 = vld [vmem:[%s0 + $0x8] sm:$0xff]
    %v20 = vlaneseq
    %v21 = vshrl.u32 %v20, 7
    %v22 = vsub.s32 0, %v21
    %v23 = vrot.slane %v16, %v22
    %vm25 = vcmask 39936
    %v27 = vsel %vm25, %v17, 0
    %v30 = vsel %vm25, %v18, 0
    %vm32 = vcmask 1044480
    %v34 = vsel %vm32, %v15, 0
    %36 = vmatprep.subr.mxu0 0.0
    %37 = vmatpush1.msra.mxu0 %v34
    %38 = vmatprep.subr.mxu0 0.0
    %39 = vmatpush1.msra.mxu0 0.0
    %40 = vmatprep.subr.mxu0 0.0
    %41 = vmatpush1.msra.mxu0 0.0
    %42 = vmatprep.subr.mxu0 0.0
    %43 = vmatpush1.msra.mxu0 0.0
    %44 = vmatprep.subr.mxu0 0.0
    %45 = vmatpush1.msra.mxu0 0.0
    %46 = vmatprep.subr.mxu0 0.0
    %47 = vmatpush1.msra.mxu0 0.0
    %48 = vmatprep.subr.mxu0 0.0
    %49 = vmatpush1.msra.mxu0 0.0
    %50 = vmatprep.subr.mxu0 0.0
    %51 = vmatpush1.msra.mxu0 0.0
    %52 = vmatprep.subr.mxu0 0.0
    %53 = vmatpush1.msra.mxu0 0.0
    %54 = vmatprep.subr.mxu0 0.0
    %55 = vmatpush1.msra.mxu0 0.0
    %56 = vmatprep.subr.mxu0 0.0
    %57 = vmatpush1.msra.mxu0 0.0
    %58 = vmatprep.subr.mxu0 0.0
    %59 = vmatpush1.msra.mxu0 0.0
    %60 = vmatprep.subr.mxu0 0.0
    %61 = vmatpush1.msra.mxu0 0.0
    %62 = vmatprep.subr.mxu0 0.0
    %63 = vmatpush1.msra.mxu0 0.0
    %64 = vmatprep.subr.mxu0 0.0
    %65 = vmatpush1.msra.mxu0 0.0
    %66 = vmatprep.subr.mxu0 0.0
    %67 = vmatpush1.msra.mxu0 0.0
    %68 = vmatprep.subr.mxu0 0.0
    %69 = vmatpush1.msra.mxu0 0.0
    %70 = vmatprep.subr.mxu0 0.0
    %71 = vmatpush1.msra.mxu0 0.0
    %72 = vmatprep.subr.mxu0 0.0
    %73 = vmatpush1.msra.mxu0 0.0
    %74 = vmatprep.subr.mxu0 0.0
    %75 = vmatpush1.msra.mxu0 0.0
    %76 = vmatprep.subr.mxu0 0.0
    %77 = vmatpush1.msra.mxu0 0.0
    %78 = vmatprep.subr.mxu0 0.0
    %79 = vmatpush1.msra.mxu0 0.0
    %80 = vmatprep.subr.mxu0 0.0
    %81 = vmatpush1.msra.mxu0 0.0
    %82 = vmatprep.subr.mxu0 0.0
    %83 = vmatpush1.msra.mxu0 0.0
    %84 = vmatprep.subr.mxu0 0.0
    %85 = vmatpush1.msra.mxu0 0.0
    %86 = vmatprep.subr.mxu0 0.0
    %87 = vmatpush1.msra.mxu0 0.0
    %88 = vmatprep.subr.mxu0 0.0
    %89 = vmatpush1.msra.mxu0 0.0
    %90 = vmatprep.subr.mxu0 0.0
    %91 = vmatpush1.msra.mxu0 0.0
    %92 = vmatprep.subr.mxu0 0.0
    %93 = vmatpush1.msra.mxu0 0.0
    %94 = vmatprep.subr.mxu0 0.0
    %95 = vmatpush1.msra.mxu0 0.0
    %96 = vmatprep.subr.mxu0 0.0
    %97 = vmatpush1.msra.mxu0 0.0
    %98 = vmatprep.subr.mxu0 0.0
    %99 = vmatpush1.msra.mxu0 0.0
    %100 = vmatprep.mubr.f32.mxu0 0.0
    %101 = vmatmul.mubr.f32.gmra.mrb[0].mxu0 %v27
    %v102 = vpop.f32.mrb[0].mxu0
    %v103 = vadd.f32 %v23, %v102
    %v104 = vpop.f32.mrb[0].mxu0
    %105 = vmatprep.mubr.f32.mxu0 0.0
    %106 = vmatmul.mubr.f32.gmra.mrb[0].mxu0 %v30
    %v107 = vpop.f32.mrb[0].mxu0
    %v108 = vadd.f32 %v23, %v107
    %v109 = vpop.f32.mrb[0].mxu0
    %110 = vdwg.mxu0
    %111 = vrot.lane.b32.xlu0 %v15, 113
    %v112 = vpop.permute.xlu0 %111
    %v114 = vsel %vm25, 0.0, 0
    %v116 = vsel %vm32, %v112, 0
    %118 = vmatprep.subr.mxu0 0.0
    %119 = vmatpush1.msra.mxu0 %v116
    %120 = vmatprep.subr.mxu0 0.0
    %121 = vmatpush1.msra.mxu0 0.0
    %122 = vmatprep.subr.mxu0 0.0
    %123 = vmatpush1.msra.mxu0 0.0
    %124 = vmatprep.subr.mxu0 0.0
    %125 = vmatpush1.msra.mxu0 0.0
    %126 = vmatprep.subr.mxu0 0.0
    %127 = vmatpush1.msra.mxu0 0.0
    %128 = vmatprep.subr.mxu0 0.0
    %129 = vmatpush1.msra.mxu0 0.0
    %130 = vmatprep.subr.mxu0 0.0
    %131 = vmatpush1.msra.mxu0 0.0
    %132 = vmatprep.subr.mxu0 0.0
    %133 = vmatpush1.msra.mxu0 0.0
    %134 = vmatprep.subr.mxu0 0.0
    %135 = vmatpush1.msra.mxu0 0.0
    %136 = vmatprep.subr.mxu0 0.0
    %137 = vmatpush1.msra.mxu0 0.0
    %138 = vmatprep.subr.mxu0 0.0
    %139 = vmatpush1.msra.mxu0 0.0
    %140 = vmatprep.subr.mxu0 0.0
    %141 = vmatpush1.msra.mxu0 0.0
    %142 = vmatprep.subr.mxu0 0.0
    %143 = vmatpush1.msra.mxu0 0.0
    %144 = vmatprep.subr.mxu0 0.0
    %145 = vmatpush1.msra.mxu0 0.0
    %146 = vmatprep.subr.mxu0 0.0
    %147 = vmatpush1.msra.mxu0 0.0
    %148 = vmatprep.subr.mxu0 0.0
    %149 = vmatpush1.msra.mxu0 0.0
    %150 = vmatprep.subr.mxu0 0.0
    %151 = vmatpush1.msra.mxu0 0.0
    %152 = vmatprep.subr.mxu0 0.0
    %153 = vmatpush1.msra.mxu0 0.0
    %154 = vmatprep.subr.mxu0 0.0
    %155 = vmatpush1.msra.mxu0 0.0
    %156 = vmatprep.subr.mxu0 0.0
    %157 = vmatpush1.msra.mxu0 0.0
    %158 = vmatprep.subr.mxu0 0.0
    %159 = vmatpush1.msra.mxu0 0.0
    %160 = vmatprep.subr.mxu0 0.0
    %161 = vmatpush1.msra.mxu0 0.0
    %162 = vmatprep.subr.mxu0 0.0
    %163 = vmatpush1.msra.mxu0 0.0
    %164 = vmatprep.subr.mxu0 0.0
    %165 = vmatpush1.msra.mxu0 0.0
    %166 = vmatprep.subr.mxu0 0.0
    %167 = vmatpush1.msra.mxu0 0.0
    %168 = vmatprep.subr.mxu0 0.0
    %169 = vmatpush1.msra.mxu0 0.0
    %170 = vmatprep.subr.mxu0 0.0
    %171 = vmatpush1.msra.mxu0 0.0
    %172 = vmatprep.subr.mxu0 0.0
    %173 = vmatpush1.msra.mxu0 0.0
    %174 = vmatprep.subr.mxu0 0.0
    %175 = vmatpush1.msra.mxu0 0.0
    %176 = vmatprep.subr.mxu0 0.0
    %177 = vmatpush1.msra.mxu0 0.0
    %178 = vmatprep.subr.mxu0 0.0
    %179 = vmatpush1.msra.mxu0 0.0
    %180 = vmatprep.subr.mxu0 0.0
    %181 = vmatpush1.msra.mxu0 0.0
    %182 = vmatprep.mubr.f32.mxu0 0.0
    %183 = vmatmul.mubr.f32.gmra.mrb[0].mxu0 %v114
    %v184 = vpop.f32.mrb[0].mxu0
    %v185 = vadd.f32 0.0, %v184
    %v186 = vpop.f32.mrb[0].mxu0
    %187 = vdwg.mxu0
    %v189 = vrot.slane %v185, 1
    %v192 = vadd.f32 %v103, %v185
    %v193 = vadd.f32 %v108, %v189
    %v194 = vxor.u32 %v192, 2147483648
    %v195 = vxor.u32 %v193, 2147483648
    %v196 = vmul.f32 %v194, 1.442695
    %v197 = vpow.pop %v196
    %v198 = vmul.f32 %v195, 1.442695
    %v199 = vpow.pop %v198
    %v200 = vadd.f32 %v197, 1.0
    %v201 = vadd.f32 %v199, 1.0
    %v202 = vrcp.pop %v200
    %v203 = vmul.f32 1.0, %v202
    %v204 = vrcp.pop %v201
    %v205 = vmul.f32 1.0, %v204
    %206 = vrot.lane.b32.xlu0 %v23, 123
    %v207 = vpop.permute.xlu0 %206
    %v209 = vadd.f32 %v185, %v207
    %v211 = vrot.slane %v209, 1
    %212 = vrot.lane.b32.xlu0 %v209, 118
    %v213 = vpop.permute.xlu0 %212
    %214 = vrot.lane.b32.xlu0 %v211, 118
    %v215 = vpop.permute.xlu0 %214
    %v218 = vmul.f32 %v203, %v213
    %v219 = vmul.f32 %v205, %v215
    %222 = vrot.lane.b32.xlu0 %v218, 10
    %v223 = vpop.permute.xlu0 %222
    %224 = vrot.lane.b32.xlu0 %v219, 10
    %v225 = vpop.permute.xlu0 %224
    %v228 = vadd.f32 %v103, %v223
    %v229 = vadd.f32 %v108, %v225
    %v230 = vtanh.pop %v228
    %v231 = vtanh.pop %v229
    %v232 = vsub.f32 1.0, %v203
    %v233 = vsub.f32 1.0, %v205
    %236 = vrot.lane.b32.xlu0 %v230, 123
    %v237 = vpop.permute.xlu0 %236
    %238 = vrot.lane.b32.xlu0 %v231, 123
    %v239 = vpop.permute.xlu0 %238
    %v242 = vmul.f32 %v232, %v237
    %v243 = vmul.f32 %v233, %v239
    %v244 = vmul.f32 %v203, 0.0
    %v245 = vmul.f32 %v205, 0.0
    %v246 = vadd.f32 %v242, %v244
    %v247 = vadd.f32 %v243, %v245
    %v250 = vrot.slane %v247, 7
    %vm251 = vcmask 1041409
    %v252 = vsel %vm251, %v250, %v246
    %253 = vrot.lane.b32.xlu0 %v252, 123
    %v254 = vpop.permute.xlu0 %253
    %v255 = vsel %vm25, %v254, 0
    %257 = vmatprep.subr.mxu0 0.0
    %258 = vmatpush1.msra.mxu0 %v116
    %259 = vmatprep.subr.mxu0 0.0
    %260 = vmatpush1.msra.mxu0 0.0
    %261 = vmatprep.subr.mxu0 0.0
    %262 = vmatpush1.msra.mxu0 0.0
    %263 = vmatprep.subr.mxu0 0.0
    %264 = vmatpush1.msra.mxu0 0.0
    %265 = vmatprep.subr.mxu0 0.0
    %266 = vmatpush1.msra.mxu0 0.0
    %267 = vmatprep.subr.mxu0 0.0
    %268 = vmatpush1.msra.mxu0 0.0
    %269 = vmatprep.subr.mxu0 0.0
    %270 = vmatpush1.msra.mxu0 0.0
    %271 = vmatprep.subr.mxu0 0.0
    %272 = vmatpush1.msra.mxu0 0.0
    %273 = vmatprep.subr.mxu0 0.0
    %274 = vmatpush1.msra.mxu0 0.0
    %275 = vmatprep.subr.mxu0 0.0
    %276 = vmatpush1.msra.mxu0 0.0
    %277 = vmatprep.subr.mxu0 0.0
    %278 = vmatpush1.msra.mxu0 0.0
    %279 = vmatprep.subr.mxu0 0.0
    %280 = vmatpush1.msra.mxu0 0.0
    %281 = vmatprep.subr.mxu0 0.0
    %282 = vmatpush1.msra.mxu0 0.0
    %283 = vmatprep.subr.mxu0 0.0
    %284 = vmatpush1.msra.mxu0 0.0
    %285 = vmatprep.subr.mxu0 0.0
    %286 = vmatpush1.msra.mxu0 0.0
    %287 = vmatprep.subr.mxu0 0.0
    %288 = vmatpush1.msra.mxu0 0.0
    %289 = vmatprep.subr.mxu0 0.0
    %290 = vmatpush1.msra.mxu0 0.0
    %291 = vmatprep.subr.mxu0 0.0
    %292 = vmatpush1.msra.mxu0 0.0
    %293 = vmatprep.subr.mxu0 0.0
    %294 = vmatpush1.msra.mxu0 0.0
    %295 = vmatprep.subr.mxu0 0.0
    %296 = vmatpush1.msra.mxu0 0.0
    %297 = vmatprep.subr.mxu0 0.0
    %298 = vmatpush1.msra.mxu0 0.0
    %299 = vmatprep.subr.mxu0 0.0
    %300 = vmatpush1.msra.mxu0 0.0
    %301 = vmatprep.subr.mxu0 0.0
    %302 = vmatpush1.msra.mxu0 0.0
    %303 = vmatprep.subr.mxu0 0.0
    %304 = vmatpush1.msra.mxu0 0.0
    %305 = vmatprep.subr.mxu0 0.0
    %306 = vmatpush1.msra.mxu0 0.0
    %307 = vmatprep.subr.mxu0 0.0
    %308 = vmatpush1.msra.mxu0 0.0
    %309 = vmatprep.subr.mxu0 0.0
    %310 = vmatpush1.msra.mxu0 0.0
    %311 = vmatprep.subr.mxu0 0.0
    %312 = vmatpush1.msra.mxu0 0.0
    %313 = vmatprep.subr.mxu0 0.0
    %314 = vmatpush1.msra.mxu0 0.0
    %315 = vmatprep.subr.mxu0 0.0
    %316 = vmatpush1.msra.mxu0 0.0
    %317 = vmatprep.subr.mxu0 0.0
    %318 = vmatpush1.msra.mxu0 0.0
    %319 = vmatprep.subr.mxu0 0.0
    %320 = vmatpush1.msra.mxu0 0.0
    %321 = vmatprep.mubr.f32.mxu0 0.0
    %322 = vmatmul.mubr.f32.gmra.mrb[0].mxu0 %v255
    %v323 = vpop.f32.mrb[0].mxu0
    %v324 = vadd.f32 0.0, %v323
    %v325 = vpop.f32.mrb[0].mxu0
    %326 = vdwg.mxu0
    %v328 = vrot.slane %v324, 7
    %v331 = vadd.f32 %v103, %v328
    %v332 = vadd.f32 %v108, %v324
    %v333 = vxor.u32 %v331, 2147483648
    %v334 = vxor.u32 %v332, 2147483648
    %v335 = vmul.f32 %v333, 1.442695
    %v336 = vpow.pop %v335
    %v337 = vmul.f32 %v334, 1.442695
    %v338 = vpow.pop %v337
    %v339 = vadd.f32 %v336, 1.0
    %v340 = vadd.f32 %v338, 1.0
    %v341 = vrcp.pop %v339
    %v342 = vmul.f32 1.0, %v341
    %v343 = vrcp.pop %v340
    %v344 = vmul.f32 1.0, %v343
    %v345 = vadd.f32 %v324, %v207
    %v347 = vrot.slane %v345, 7
    %348 = vrot.lane.b32.xlu0 %v347, 118
    %v349 = vpop.permute.xlu0 %348
    %350 = vrot.lane.b32.xlu0 %v345, 118
    %v351 = vpop.permute.xlu0 %350
    %v354 = vmul.f32 %v342, %v349
    %v355 = vmul.f32 %v344, %v351
    %358 = vrot.lane.b32.xlu0 %v354, 10
    %v359 = vpop.permute.xlu0 %358
    %360 = vrot.lane.b32.xlu0 %v355, 10
    %v361 = vpop.permute.xlu0 %360
    %v364 = vadd.f32 %v103, %v359
    %v365 = vadd.f32 %v108, %v361
    %v366 = vtanh.pop %v364
    %v367 = vtanh.pop %v365
    %v368 = vsub.f32 1.0, %v342
    %v369 = vsub.f32 1.0, %v344
    %372 = vrot.lane.b32.xlu0 %v366, 123
    %v373 = vpop.permute.xlu0 %372
    %374 = vrot.lane.b32.xlu0 %v367, 123
    %v375 = vpop.permute.xlu0 %374
    %v378 = vmul.f32 %v368, %v373
    %v379 = vmul.f32 %v369, %v375
    %v380 = vrot.slane %v246, 7
    %v383 = vmul.f32 %v342, %v380
    %v384 = vmul.f32 %v344, %v250
    %v385 = vadd.f32 %v378, %v383
    %v386 = vadd.f32 %v379, %v384
    %v389 = vrot.slane %v385, 1
    %v390 = vsel %vm251, %v386, %v389
    %391 = vrot.lane.b32.xlu0 %v390, 123
    %v392 = vpop.permute.xlu0 %391
    %v393 = vsel %vm25, %v392, 0
    %395 = vmatprep.subr.mxu0 0.0
    %396 = vmatpush1.msra.mxu0 %v116
    %397 = vmatprep.subr.mxu0 0.0
    %398 = vmatpush1.msra.mxu0 0.0
    %399 = vmatprep.subr.mxu0 0.0
    %400 = vmatpush1.msra.mxu0 0.0
    %401 = vmatprep.subr.mxu0 0.0
    %402 = vmatpush1.msra.mxu0 0.0
    %403 = vmatprep.subr.mxu0 0.0
    %404 = vmatpush1.msra.mxu0 0.0
    %405 = vmatprep.subr.mxu0 0.0
    %406 = vmatpush1.msra.mxu0 0.0
    %407 = vmatprep.subr.mxu0 0.0
    %408 = vmatpush1.msra.mxu0 0.0
    %409 = vmatprep.subr.mxu0 0.0
    %410 = vmatpush1.msra.mxu0 0.0
    %411 = vmatprep.subr.mxu0 0.0
    %412 = vmatpush1.msra.mxu0 0.0
    %413 = vmatprep.subr.mxu0 0.0
    %414 = vmatpush1.msra.mxu0 0.0
    %415 = vmatprep.subr.mxu0 0.0
    %416 = vmatpush1.msra.mxu0 0.0
    %417 = vmatprep.subr.mxu0 0.0
    %418 = vmatpush1.msra.mxu0 0.0
    %419 = vmatprep.subr.mxu0 0.0
    %420 = vmatpush1.msra.mxu0 0.0
    %421 = vmatprep.subr.mxu0 0.0
    %422 = vmatpush1.msra.mxu0 0.0
    %423 = vmatprep.subr.mxu0 0.0
    %424 = vmatpush1.msra.mxu0 0.0
    %425 = vmatprep.subr.mxu0 0.0
    %426 = vmatpush1.msra.mxu0 0.0
    %427 = vmatprep.subr.mxu0 0.0
    %428 = vmatpush1.msra.mxu0 0.0
    %429 = vmatprep.subr.mxu0 0.0
    %430 = vmatpush1.msra.mxu0 0.0
    %431 = vmatprep.subr.mxu0 0.0
    %432 = vmatpush1.msra.mxu0 0.0
    %433 = vmatprep.subr.mxu0 0.0
    %434 = vmatpush1.msra.mxu0 0.0
    %435 = vmatprep.subr.mxu0 0.0
    %436 = vmatpush1.msra.mxu0 0.0
    %437 = vmatprep.subr.mxu0 0.0
    %438 = vmatpush1.msra.mxu0 0.0
    %439 = vmatprep.subr.mxu0 0.0
    %440 = vmatpush1.msra.mxu0 0.0
    %441 = vmatprep.subr.mxu0 0.0
    %442 = vmatpush1.msra.mxu0 0.0
    %443 = vmatprep.subr.mxu0 0.0
    %444 = vmatpush1.msra.mxu0 0.0
    %445 = vmatprep.subr.mxu0 0.0
    %446 = vmatpush1.msra.mxu0 0.0
    %447 = vmatprep.subr.mxu0 0.0
    %448 = vmatpush1.msra.mxu0 0.0
    %449 = vmatprep.subr.mxu0 0.0
    %450 = vmatpush1.msra.mxu0 0.0
    %451 = vmatprep.subr.mxu0 0.0
    %452 = vmatpush1.msra.mxu0 0.0
    %453 = vmatprep.subr.mxu0 0.0
    %454 = vmatpush1.msra.mxu0 0.0
    %455 = vmatprep.subr.mxu0 0.0
    %456 = vmatpush1.msra.mxu0 0.0
    %457 = vmatprep.subr.mxu0 0.0
    %458 = vmatpush1.msra.mxu0 0.0
    %459 = vmatprep.mubr.f32.mxu0 0.0
    %460 = vmatmul.mubr.f32.gmra.mrb[0].mxu0 %v393
    %v461 = vpop.f32.mrb[0].mxu0
    %v462 = vadd.f32 0.0, %v461
    %v463 = vpop.f32.mrb[0].mxu0
    %464 = vdwg.mxu0
    %v466 = vrot.slane %v462, 6
    %v467 = vrot.slane %v462, 7
    %v470 = vadd.f32 %v103, %v466
    %v471 = vadd.f32 %v108, %v467
    %v472 = vxor.u32 %v470, 2147483648
    %v473 = vxor.u32 %v471, 2147483648
    %v474 = vmul.f32 %v472, 1.442695
    %v475 = vpow.pop %v474
    %v476 = vmul.f32 %v473, 1.442695
    %v477 = vpow.pop %v476
    %v478 = vadd.f32 %v475, 1.0
    %v479 = vadd.f32 %v477, 1.0
    %v480 = vrcp.pop %v478
    %v481 = vmul.f32 1.0, %v480
    %v482 = vrcp.pop %v479
    %v483 = vmul.f32 1.0, %v482
    %v484 = vadd.f32 %v462, %v207
    %v486 = vrot.slane %v484, 6
    %v487 = vrot.slane %v484, 7
    %488 = vrot.lane.b32.xlu0 %v486, 118
    %v489 = vpop.permute.xlu0 %488
    %490 = vrot.lane.b32.xlu0 %v487, 118
    %v491 = vpop.permute.xlu0 %490
    %v494 = vmul.f32 %v481, %v489
    %v495 = vmul.f32 %v483, %v491
    %498 = vrot.lane.b32.xlu0 %v494, 10
    %v499 = vpop.permute.xlu0 %498
    %500 = vrot.lane.b32.xlu0 %v495, 10
    %v501 = vpop.permute.xlu0 %500
    %v504 = vadd.f32 %v103, %v499
    %v505 = vadd.f32 %v108, %v501
    %v506 = vtanh.pop %v504
    %v507 = vtanh.pop %v505
    %v508 = vsub.f32 1.0, %v481
    %v509 = vsub.f32 1.0, %v483
    %512 = vrot.lane.b32.xlu0 %v506, 123
    %v513 = vpop.permute.xlu0 %512
    %514 = vrot.lane.b32.xlu0 %v507, 123
    %v515 = vpop.permute.xlu0 %514
    %v518 = vmul.f32 %v508, %v513
    %v519 = vmul.f32 %v509, %v515
    %v520 = vrot.slane %v385, 7
    %v521 = vrot.slane %v386, 7
    %v524 = vmul.f32 %v481, %v520
    %v525 = vmul.f32 %v483, %v521
    %v526 = vadd.f32 %v518, %v524
    %v527 = vadd.f32 %v519, %v525
    %v530 = vrot.slane %v526, 2
    %v531 = vrot.slane %v527, 1
    %v532 = vsel %vm251, %v531, %v530
    %533 = vrot.lane.b32.xlu0 %v532, 123
    %v534 = vpop.permute.xlu0 %533
    %v535 = vsel %vm25, %v534, 0
    %537 = vmatprep.subr.mxu0 0.0
    %538 = vmatpush1.msra.mxu0 %v116
    %539 = vmatprep.subr.mxu0 0.0
    %540 = vmatpush1.msra.mxu0 0.0
    %541 = vmatprep.subr.mxu0 0.0
    %542 = vmatpush1.msra.mxu0 0.0
    %543 = vmatprep.subr.mxu0 0.0
    %544 = vmatpush1.msra.mxu0 0.0
    %545 = vmatprep.subr.mxu0 0.0
    %546 = vmatpush1.msra.mxu0 0.0
    %547 = vmatprep.subr.mxu0 0.0
    %548 = vmatpush1.msra.mxu0 0.0
    %549 = vmatprep.subr.mxu0 0.0
    %550 = vmatpush1.msra.mxu0 0.0
    %551 = vmatprep.subr.mxu0 0.0
    %552 = vmatpush1.msra.mxu0 0.0
    %553 = vmatprep.subr.mxu0 0.0
    %554 = vmatpush1.msra.mxu0 0.0
    %555 = vmatprep.subr.mxu0 0.0
    %556 = vmatpush1.msra.mxu0 0.0
    %557 = vmatprep.subr.mxu0 0.0
    %558 = vmatpush1.msra.mxu0 0.0
    %559 = vmatprep.subr.mxu0 0.0
    %560 = vmatpush1.msra.mxu0 0.0
    %561 = vmatprep.subr.mxu0 0.0
    %562 = vmatpush1.msra.mxu0 0.0
    %563 = vmatprep.subr.mxu0 0.0
    %564 = vmatpush1.msra.mxu0 0.0
    %565 = vmatprep.subr.mxu0 0.0
    %566 = vmatpush1.msra.mxu0 0.0
    %567 = vmatprep.subr.mxu0 0.0
    %568 = vmatpush1.msra.mxu0 0.0
    %569 = vmatprep.subr.mxu0 0.0
    %570 = vmatpush1.msra.mxu0 0.0
    %571 = vmatprep.subr.mxu0 0.0
    %572 = vmatpush1.msra.mxu0 0.0
    %573 = vmatprep.subr.mxu0 0.0
    %574 = vmatpush1.msra.mxu0 0.0
    %575 = vmatprep.subr.mxu0 0.0
    %576 = vmatpush1.msra.mxu0 0.0
    %577 = vmatprep.subr.mxu0 0.0
    %578 = vmatpush1.msra.mxu0 0.0
    %579 = vmatprep.subr.mxu0 0.0
    %580 = vmatpush1.msra.mxu0 0.0
    %581 = vmatprep.subr.mxu0 0.0
    %582 = vmatpush1.msra.mxu0 0.0
    %583 = vmatprep.subr.mxu0 0.0
    %584 = vmatpush1.msra.mxu0 0.0
    %585 = vmatprep.subr.mxu0 0.0
    %586 = vmatpush1.msra.mxu0 0.0
    %587 = vmatprep.subr.mxu0 0.0
    %588 = vmatpush1.msra.mxu0 0.0
    %589 = vmatprep.subr.mxu0 0.0
    %590 = vmatpush1.msra.mxu0 0.0
    %591 = vmatprep.subr.mxu0 0.0
    %592 = vmatpush1.msra.mxu0 0.0
    %593 = vmatprep.subr.mxu0 0.0
    %594 = vmatpush1.msra.mxu0 0.0
    %595 = vmatprep.subr.mxu0 0.0
    %596 = vmatpush1.msra.mxu0 0.0
    %597 = vmatprep.subr.mxu0 0.0
    %598 = vmatpush1.msra.mxu0 0.0
    %599 = vmatprep.subr.mxu0 0.0
    %600 = vmatpush1.msra.mxu0 0.0
    %601 = vmatprep.mubr.f32.mxu0 0.0
    %602 = vmatmul.mubr.f32.gmra.mrb[0].mxu0 %v535
    %v603 = vpop.f32.mrb[0].mxu0
    %v604 = vadd.f32 0.0, %v603
    %v605 = vpop.f32.mrb[0].mxu0
    %606 = vdwg.mxu0
    %v608 = vrot.slane %v604, 5
    %v609 = vrot.slane %v604, 6
    %v612 = vadd.f32 %v103, %v608
    %v613 = vadd.f32 %v108, %v609
    %v614 = vxor.u32 %v612, 2147483648
    %v615 = vxor.u32 %v613, 2147483648
    %v616 = vmul.f32 %v614, 1.442695
    %v617 = vpow.pop %v616
    %v618 = vmul.f32 %v615, 1.442695
    %v619 = vpow.pop %v618
    %v620 = vadd.f32 %v617, 1.0
    %v621 = vadd.f32 %v619, 1.0
    %v622 = vrcp.pop %v620
    %v623 = vmul.f32 1.0, %v622
    %v624 = vrcp.pop %v621
    %v625 = vmul.f32 1.0, %v624
    %v626 = vadd.f32 %v604, %v207
    %v628 = vrot.slane %v626, 5
    %v629 = vrot.slane %v626, 6
    %630 = vrot.lane.b32.xlu0 %v628, 118
    %v631 = vpop.permute.xlu0 %630
    %632 = vrot.lane.b32.xlu0 %v629, 118
    %v633 = vpop.permute.xlu0 %632
    %v636 = vmul.f32 %v623, %v631
    %v637 = vmul.f32 %v625, %v633
    %640 = vrot.lane.b32.xlu0 %v636, 10
    %v641 = vpop.permute.xlu0 %640
    %642 = vrot.lane.b32.xlu0 %v637, 10
    %v643 = vpop.permute.xlu0 %642
    %v646 = vadd.f32 %v103, %v641
    %v647 = vadd.f32 %v108, %v643
    %v648 = vtanh.pop %v646
    %v649 = vtanh.pop %v647
    %v650 = vsub.f32 1.0, %v623
    %v651 = vsub.f32 1.0, %v625
    %654 = vrot.lane.b32.xlu0 %v648, 123
    %v655 = vpop.permute.xlu0 %654
    %656 = vrot.lane.b32.xlu0 %v649, 123
    %v657 = vpop.permute.xlu0 %656
    %v660 = vmul.f32 %v650, %v655
    %v661 = vmul.f32 %v651, %v657
    %v662 = vrot.slane %v526, 7
    %v663 = vrot.slane %v527, 7
    %v666 = vmul.f32 %v623, %v662
    %v667 = vmul.f32 %v625, %v663
    %v668 = vadd.f32 %v660, %v666
    %v669 = vadd.f32 %v661, %v667
    %v672 = vrot.slane %v668, 3
    %v673 = vrot.slane %v669, 2
    %v674 = vsel %vm251, %v673, %v672
    %675 = vrot.lane.b32.xlu0 %v674, 123
    %v676 = vpop.permute.xlu0 %675
    %v677 = vsel %vm25, %v676, 0
    %679 = vmatprep.subr.mxu0 0.0
    %680 = vmatpush1.msra.mxu0 %v116
    %681 = vmatprep.subr.mxu0 0.0
    %682 = vmatpush1.msra.mxu0 0.0
    %683 = vmatprep.subr.mxu0 0.0
    %684 = vmatpush1.msra.mxu0 0.0
    %685 = vmatprep.subr.mxu0 0.0
    %686 = vmatpush1.msra.mxu0 0.0
    %687 = vmatprep.subr.mxu0 0.0
    %688 = vmatpush1.msra.mxu0 0.0
    %689 = vmatprep.subr.mxu0 0.0
    %690 = vmatpush1.msra.mxu0 0.0
    %691 = vmatprep.subr.mxu0 0.0
    %692 = vmatpush1.msra.mxu0 0.0
    %693 = vmatprep.subr.mxu0 0.0
    %694 = vmatpush1.msra.mxu0 0.0
    %695 = vmatprep.subr.mxu0 0.0
    %696 = vmatpush1.msra.mxu0 0.0
    %697 = vmatprep.subr.mxu0 0.0
    %698 = vmatpush1.msra.mxu0 0.0
    %699 = vmatprep.subr.mxu0 0.0
    %700 = vmatpush1.msra.mxu0 0.0
    %701 = vmatprep.subr.mxu0 0.0
    %702 = vmatpush1.msra.mxu0 0.0
    %703 = vmatprep.subr.mxu0 0.0
    %704 = vmatpush1.msra.mxu0 0.0
    %705 = vmatprep.subr.mxu0 0.0
    %706 = vmatpush1.msra.mxu0 0.0
    %707 = vmatprep.subr.mxu0 0.0
    %708 = vmatpush1.msra.mxu0 0.0
    %709 = vmatprep.subr.mxu0 0.0
    %710 = vmatpush1.msra.mxu0 0.0
    %711 = vmatprep.subr.mxu0 0.0
    %712 = vmatpush1.msra.mxu0 0.0
    %713 = vmatprep.subr.mxu0 0.0
    %714 = vmatpush1.msra.mxu0 0.0
    %715 = vmatprep.subr.mxu0 0.0
    %716 = vmatpush1.msra.mxu0 0.0
    %717 = vmatprep.subr.mxu0 0.0
    %718 = vmatpush1.msra.mxu0 0.0
    %719 = vmatprep.subr.mxu0 0.0
    %720 = vmatpush1.msra.mxu0 0.0
    %721 = vmatprep.subr.mxu0 0.0
    %722 = vmatpush1.msra.mxu0 0.0
    %723 = vmatprep.subr.mxu0 0.0
    %724 = vmatpush1.msra.mxu0 0.0
    %725 = vmatprep.subr.mxu0 0.0
    %726 = vmatpush1.msra.mxu0 0.0
    %727 = vmatprep.subr.mxu0 0.0
    %728 = vmatpush1.msra.mxu0 0.0
    %729 = vmatprep.subr.mxu0 0.0
    %730 = vmatpush1.msra.mxu0 0.0
    %731 = vmatprep.subr.mxu0 0.0
    %732 = vmatpush1.msra.mxu0 0.0
    %733 = vmatprep.subr.mxu0 0.0
    %734 = vmatpush1.msra.mxu0 0.0
    %735 = vmatprep.subr.mxu0 0.0
    %736 = vmatpush1.msra.mxu0 0.0
    %737 = vmatprep.subr.mxu0 0.0
    %738 = vmatpush1.msra.mxu0 0.0
    %739 = vmatprep.subr.mxu0 0.0
    %740 = vmatpush1.msra.mxu0 0.0
    %741 = vmatprep.subr.mxu0 0.0
    %742 = vmatpush1.msra.mxu0 0.0
    %743 = vmatprep.mubr.f32.mxu0 0.0
    %744 = vmatmul.mubr.f32.gmra.mrb[0].mxu0 %v677
    %v745 = vpop.f32.mrb[0].mxu0
    %v746 = vadd.f32 0.0, %v745
    %v747 = vpop.f32.mrb[0].mxu0
    %748 = vdwg.mxu0
    %v750 = vrot.slane %v746, 4
    %v751 = vrot.slane %v746, 5
    %v754 = vadd.f32 %v103, %v750
    %v755 = vadd.f32 %v108, %v751
    %v756 = vxor.u32 %v754, 2147483648
    %v757 = vxor.u32 %v755, 2147483648
    %v758 = vmul.f32 %v756, 1.442695
    %v759 = vpow.pop %v758
    %v760 = vmul.f32 %v757, 1.442695
    %v761 = vpow.pop %v760
    %v762 = vadd.f32 %v759, 1.0
    %v763 = vadd.f32 %v761, 1.0
    %v764 = vrcp.pop %v762
    %v765 = vmul.f32 1.0, %v764
    %v766 = vrcp.pop %v763
    %v767 = vmul.f32 1.0, %v766
    %v768 = vadd.f32 %v746, %v207
    %v770 = vrot.slane %v768, 4
    %v771 = vrot.slane %v768, 5
    %772 = vrot.lane.b32.xlu0 %v770, 118
    %v773 = vpop.permute.xlu0 %772
    %774 = vrot.lane.b32.xlu0 %v771, 118
    %v775 = vpop.permute.xlu0 %774
    %v778 = vmul.f32 %v765, %v773
    %v779 = vmul.f32 %v767, %v775
    %782 = vrot.lane.b32.xlu0 %v778, 10
    %v783 = vpop.permute.xlu0 %782
    %784 = vrot.lane.b32.xlu0 %v779, 10
    %v785 = vpop.permute.xlu0 %784
    %v788 = vadd.f32 %v103, %v783
    %v789 = vadd.f32 %v108, %v785
    %v790 = vtanh.pop %v788
    %v791 = vtanh.pop %v789
    %v792 = vsub.f32 1.0, %v765
    %v793 = vsub.f32 1.0, %v767
    %796 = vrot.lane.b32.xlu0 %v790, 123
    %v797 = vpop.permute.xlu0 %796
    %798 = vrot.lane.b32.xlu0 %v791, 123
    %v799 = vpop.permute.xlu0 %798
    %v802 = vmul.f32 %v792, %v797
    %v803 = vmul.f32 %v793, %v799
    %v804 = vrot.slane %v668, 7
    %v805 = vrot.slane %v669, 7
    %v808 = vmul.f32 %v765, %v804
    %v809 = vmul.f32 %v767, %v805
    %v810 = vadd.f32 %v802, %v808
    %v811 = vadd.f32 %v803, %v809
    %v814 = vrot.slane %v810, 4
    %v815 = vrot.slane %v811, 3
    %v816 = vsel %vm251, %v815, %v814
    %817 = vrot.lane.b32.xlu0 %v816, 123
    %v818 = vpop.permute.xlu0 %817
    %v819 = vsel %vm25, %v818, 0
    %821 = vmatprep.subr.mxu0 0.0
    %822 = vmatpush1.msra.mxu0 %v116
    %823 = vmatprep.subr.mxu0 0.0
    %824 = vmatpush1.msra.mxu0 0.0
    %825 = vmatprep.subr.mxu0 0.0
    %826 = vmatpush1.msra.mxu0 0.0
    %827 = vmatprep.subr.mxu0 0.0
    %828 = vmatpush1.msra.mxu0 0.0
    %829 = vmatprep.subr.mxu0 0.0
    %830 = vmatpush1.msra.mxu0 0.0
    %831 = vmatprep.subr.mxu0 0.0
    %832 = vmatpush1.msra.mxu0 0.0
    %833 = vmatprep.subr.mxu0 0.0
    %834 = vmatpush1.msra.mxu0 0.0
    %835 = vmatprep.subr.mxu0 0.0
    %836 = vmatpush1.msra.mxu0 0.0
    %837 = vmatprep.subr.mxu0 0.0
    %838 = vmatpush1.msra.mxu0 0.0
    %839 = vmatprep.subr.mxu0 0.0
    %840 = vmatpush1.msra.mxu0 0.0
    %841 = vmatprep.subr.mxu0 0.0
    %842 = vmatpush1.msra.mxu0 0.0
    %843 = vmatprep.subr.mxu0 0.0
    %844 = vmatpush1.msra.mxu0 0.0
    %845 = vmatprep.subr.mxu0 0.0
    %846 = vmatpush1.msra.mxu0 0.0
    %847 = vmatprep.subr.mxu0 0.0
    %848 = vmatpush1.msra.mxu0 0.0
    %849 = vmatprep.subr.mxu0 0.0
    %850 = vmatpush1.msra.mxu0 0.0
    %851 = vmatprep.subr.mxu0 0.0
    %852 = vmatpush1.msra.mxu0 0.0
    %853 = vmatprep.subr.mxu0 0.0
    %854 = vmatpush1.msra.mxu0 0.0
    %855 = vmatprep.subr.mxu0 0.0
    %856 = vmatpush1.msra.mxu0 0.0
    %857 = vmatprep.subr.mxu0 0.0
    %858 = vmatpush1.msra.mxu0 0.0
    %859 = vmatprep.subr.mxu0 0.0
    %860 = vmatpush1.msra.mxu0 0.0
    %861 = vmatprep.subr.mxu0 0.0
    %862 = vmatpush1.msra.mxu0 0.0
    %863 = vmatprep.subr.mxu0 0.0
    %864 = vmatpush1.msra.mxu0 0.0
    %865 = vmatprep.subr.mxu0 0.0
    %866 = vmatpush1.msra.mxu0 0.0
    %867 = vmatprep.subr.mxu0 0.0
    %868 = vmatpush1.msra.mxu0 0.0
    %869 = vmatprep.subr.mxu0 0.0
    %870 = vmatpush1.msra.mxu0 0.0
    %871 = vmatprep.subr.mxu0 0.0
    %872 = vmatpush1.msra.mxu0 0.0
    %873 = vmatprep.subr.mxu0 0.0
    %874 = vmatpush1.msra.mxu0 0.0
    %875 = vmatprep.subr.mxu0 0.0
    %876 = vmatpush1.msra.mxu0 0.0
    %877 = vmatprep.subr.mxu0 0.0
    %878 = vmatpush1.msra.mxu0 0.0
    %879 = vmatprep.subr.mxu0 0.0
    %880 = vmatpush1.msra.mxu0 0.0
    %881 = vmatprep.subr.mxu0 0.0
    %882 = vmatpush1.msra.mxu0 0.0
    %883 = vmatprep.subr.mxu0 0.0
    %884 = vmatpush1.msra.mxu0 0.0
    %885 = vmatprep.mubr.f32.mxu0 0.0
    %886 = vmatmul.mubr.f32.gmra.mrb[0].mxu0 %v819
    %v887 = vpop.f32.mrb[0].mxu0
    %v888 = vadd.f32 0.0, %v887
    %v889 = vpop.f32.mrb[0].mxu0
    %890 = vdwg.mxu0
    %v892 = vrot.slane %v888, 3
    %v893 = vrot.slane %v888, 4
    %v896 = vadd.f32 %v103, %v892
    %v897 = vadd.f32 %v108, %v893
    %v898 = vxor.u32 %v896, 2147483648
    %v899 = vxor.u32 %v897, 2147483648
    %v900 = vmul.f32 %v898, 1.442695
    %v901 = vpow.pop %v900
    %v902 = vmul.f32 %v899, 1.442695
    %v903 = vpow.pop %v902
    %v904 = vadd.f32 %v901, 1.0
    %v905 = vadd.f32 %v903, 1.0
    %v906 = vrcp.pop %v904
    %v907 = vmul.f32 1.0, %v906
    %v908 = vrcp.pop %v905
    %v909 = vmul.f32 1.0, %v908
    %v910 = vadd.f32 %v888, %v207
    %v912 = vrot.slane %v910, 3
    %v913 = vrot.slane %v910, 4
    %914 = vrot.lane.b32.xlu0 %v912, 118
    %v915 = vpop.permute.xlu0 %914
    %916 = vrot.lane.b32.xlu0 %v913, 118
    %v917 = vpop.permute.xlu0 %916
    %v920 = vmul.f32 %v907, %v915
    %v921 = vmul.f32 %v909, %v917
    %924 = vrot.lane.b32.xlu0 %v920, 10
    %v925 = vpop.permute.xlu0 %924
    %926 = vrot.lane.b32.xlu0 %v921, 10
    %v927 = vpop.permute.xlu0 %926
    %v930 = vadd.f32 %v103, %v925
    %v931 = vadd.f32 %v108, %v927
    %v932 = vtanh.pop %v930
    %v933 = vtanh.pop %v931
    %v934 = vsub.f32 1.0, %v907
    %v935 = vsub.f32 1.0, %v909
    %938 = vrot.lane.b32.xlu0 %v932, 123
    %v939 = vpop.permute.xlu0 %938
    %940 = vrot.lane.b32.xlu0 %v933, 123
    %v941 = vpop.permute.xlu0 %940
    %v944 = vmul.f32 %v934, %v939
    %v945 = vmul.f32 %v935, %v941
    %v946 = vrot.slane %v810, 7
    %v947 = vrot.slane %v811, 7
    %v950 = vmul.f32 %v907, %v946
    %v951 = vmul.f32 %v909, %v947
    %v952 = vadd.f32 %v944, %v950
    %v953 = vadd.f32 %v945, %v951
    %v956 = vrot.slane %v952, 5
    %v957 = vrot.slane %v953, 4
    %v958 = vsel %vm251, %v957, %v956
    %959 = vrot.lane.b32.xlu0 %v958, 123
    %v960 = vpop.permute.xlu0 %959
    %v961 = vsel %vm25, %v960, 0
    %963 = vmatprep.subr.mxu0 0.0
    %964 = vmatpush1.msra.mxu0 %v116
    %965 = vmatprep.subr.mxu0 0.0
    %966 = vmatpush1.msra.mxu0 0.0
    %967 = vmatprep.subr.mxu0 0.0
    %968 = vmatpush1.msra.mxu0 0.0
    %969 = vmatprep.subr.mxu0 0.0
    %970 = vmatpush1.msra.mxu0 0.0
    %971 = vmatprep.subr.mxu0 0.0
    %972 = vmatpush1.msra.mxu0 0.0
    %973 = vmatprep.subr.mxu0 0.0
    %974 = vmatpush1.msra.mxu0 0.0
    %975 = vmatprep.subr.mxu0 0.0
    %976 = vmatpush1.msra.mxu0 0.0
    %977 = vmatprep.subr.mxu0 0.0
    %978 = vmatpush1.msra.mxu0 0.0
    %979 = vmatprep.subr.mxu0 0.0
    %980 = vmatpush1.msra.mxu0 0.0
    %981 = vmatprep.subr.mxu0 0.0
    %982 = vmatpush1.msra.mxu0 0.0
    %983 = vmatprep.subr.mxu0 0.0
    %984 = vmatpush1.msra.mxu0 0.0
    %985 = vmatprep.subr.mxu0 0.0
    %986 = vmatpush1.msra.mxu0 0.0
    %987 = vmatprep.subr.mxu0 0.0
    %988 = vmatpush1.msra.mxu0 0.0
    %989 = vmatprep.subr.mxu0 0.0
    %990 = vmatpush1.msra.mxu0 0.0
    %991 = vmatprep.subr.mxu0 0.0
    %992 = vmatpush1.msra.mxu0 0.0
    %993 = vmatprep.subr.mxu0 0.0
    %994 = vmatpush1.msra.mxu0 0.0
    %995 = vmatprep.subr.mxu0 0.0
    %996 = vmatpush1.msra.mxu0 0.0
    %997 = vmatprep.subr.mxu0 0.0
    %998 = vmatpush1.msra.mxu0 0.0
    %999 = vmatprep.subr.mxu0 0.0
    %1000 = vmatpush1.msra.mxu0 0.0
    %1001 = vmatprep.subr.mxu0 0.0
    %1002 = vmatpush1.msra.mxu0 0.0
    %1003 = vmatprep.subr.mxu0 0.0
    %1004 = vmatpush1.msra.mxu0 0.0
    %1005 = vmatprep.subr.mxu0 0.0
    %1006 = vmatpush1.msra.mxu0 0.0
    %1007 = vmatprep.subr.mxu0 0.0
    %1008 = vmatpush1.msra.mxu0 0.0
    %1009 = vmatprep.subr.mxu0 0.0
    %1010 = vmatpush1.msra.mxu0 0.0
    %1011 = vmatprep.subr.mxu0 0.0
    %1012 = vmatpush1.msra.mxu0 0.0
    %1013 = vmatprep.subr.mxu0 0.0
    %1014 = vmatpush1.msra.mxu0 0.0
    %1015 = vmatprep.subr.mxu0 0.0
    %1016 = vmatpush1.msra.mxu0 0.0
    %1017 = vmatprep.subr.mxu0 0.0
    %1018 = vmatpush1.msra.mxu0 0.0
    %1019 = vmatprep.subr.mxu0 0.0
    %1020 = vmatpush1.msra.mxu0 0.0
    %1021 = vmatprep.subr.mxu0 0.0
    %1022 = vmatpush1.msra.mxu0 0.0
    %1023 = vmatprep.subr.mxu0 0.0
    %1024 = vmatpush1.msra.mxu0 0.0
    %1025 = vmatprep.subr.mxu0 0.0
    %1026 = vmatpush1.msra.mxu0 0.0
    %1027 = vmatprep.mubr.f32.mxu0 0.0
    %1028 = vmatmul.mubr.f32.gmra.mrb[0].mxu0 %v961
    %v1029 = vpop.f32.mrb[0].mxu0
    %v1030 = vadd.f32 0.0, %v1029
    %v1031 = vpop.f32.mrb[0].mxu0
    %1032 = vdwg.mxu0
    %v1034 = vrot.slane %v1030, 2
    %v1035 = vrot.slane %v1030, 3
    %v1038 = vadd.f32 %v103, %v1034
    %v1039 = vadd.f32 %v108, %v1035
    %v1040 = vxor.u32 %v1038, 2147483648
    %v1041 = vxor.u32 %v1039, 2147483648
    %v1042 = vmul.f32 %v1040, 1.442695
    %v1043 = vpow.pop %v1042
    %v1044 = vmul.f32 %v1041, 1.442695
    %v1045 = vpow.pop %v1044
    %v1046 = vadd.f32 %v1043, 1.0
    %v1047 = vadd.f32 %v1045, 1.0
    %v1048 = vrcp.pop %v1046
    %v1049 = vmul.f32 1.0, %v1048
    %v1050 = vrcp.pop %v1047
    %v1051 = vmul.f32 1.0, %v1050
    %v1052 = vadd.f32 %v1030, %v207
    %v1054 = vrot.slane %v1052, 2
    %v1055 = vrot.slane %v1052, 3
    %1056 = vrot.lane.b32.xlu0 %v1054, 118
    %v1057 = vpop.permute.xlu0 %1056
    %1058 = vrot.lane.b32.xlu0 %v1055, 118
    %v1059 = vpop.permute.xlu0 %1058
    %v1062 = vmul.f32 %v1049, %v1057
    %v1063 = vmul.f32 %v1051, %v1059
    %1066 = vrot.lane.b32.xlu0 %v1062, 10
    %v1067 = vpop.permute.xlu0 %1066
    %1068 = vrot.lane.b32.xlu0 %v1063, 10
    %v1069 = vpop.permute.xlu0 %1068
    %v1072 = vadd.f32 %v103, %v1067
    %v1073 = vadd.f32 %v108, %v1069
    %v1074 = vtanh.pop %v1072
    %v1075 = vtanh.pop %v1073
    %v1076 = vsub.f32 1.0, %v1049
    %v1077 = vsub.f32 1.0, %v1051
    %1080 = vrot.lane.b32.xlu0 %v1074, 123
    %v1081 = vpop.permute.xlu0 %1080
    %1082 = vrot.lane.b32.xlu0 %v1075, 123
    %v1083 = vpop.permute.xlu0 %1082
    %v1086 = vmul.f32 %v1076, %v1081
    %v1087 = vmul.f32 %v1077, %v1083
    %v1088 = vrot.slane %v952, 7
    %v1089 = vrot.slane %v953, 7
    %v1092 = vmul.f32 %v1049, %v1088
    %v1093 = vmul.f32 %v1051, %v1089
    %v1094 = vadd.f32 %v1086, %v1092
    %v1095 = vadd.f32 %v1087, %v1093
    %v1098 = vrot.slane %v1094, 6
    %v1099 = vrot.slane %v1095, 5
    %v1100 = vsel %vm251, %v1099, %v1098
    %1101 = vrot.lane.b32.xlu0 %v1100, 123
    %v1102 = vpop.permute.xlu0 %1101
    %v1103 = vsel %vm25, %v1102, 0
    %1105 = vmatprep.subr.mxu0 0.0
    %1106 = vmatpush1.msra.mxu0 %v116
    %1107 = vmatprep.subr.mxu0 0.0
    %1108 = vmatpush1.msra.mxu0 0.0
    %1109 = vmatprep.subr.mxu0 0.0
    %1110 = vmatpush1.msra.mxu0 0.0
    %1111 = vmatprep.subr.mxu0 0.0
    %1112 = vmatpush1.msra.mxu0 0.0
    %1113 = vmatprep.subr.mxu0 0.0
    %1114 = vmatpush1.msra.mxu0 0.0
    %1115 = vmatprep.subr.mxu0 0.0
    %1116 = vmatpush1.msra.mxu0 0.0
    %1117 = vmatprep.subr.mxu0 0.0
    %1118 = vmatpush1.msra.mxu0 0.0
    %1119 = vmatprep.subr.mxu0 0.0
    %1120 = vmatpush1.msra.mxu0 0.0
    %1121 = vmatprep.subr.mxu0 0.0
    %1122 = vmatpush1.msra.mxu0 0.0
    %1123 = vmatprep.subr.mxu0 0.0
    %1124 = vmatpush1.msra.mxu0 0.0
    %1125 = vmatprep.subr.mxu0 0.0
    %1126 = vmatpush1.msra.mxu0 0.0
    %1127 = vmatprep.subr.mxu0 0.0
    %1128 = vmatpush1.msra.mxu0 0.0
    %1129 = vmatprep.subr.mxu0 0.0
    %1130 = vmatpush1.msra.mxu0 0.0
    %1131 = vmatprep.subr.mxu0 0.0
    %1132 = vmatpush1.msra.mxu0 0.0
    %1133 = vmatprep.subr.mxu0 0.0
    %1134 = vmatpush1.msra.mxu0 0.0
    %1135 = vmatprep.subr.mxu0 0.0
    %1136 = vmatpush1.msra.mxu0 0.0
    %1137 = vmatprep.subr.mxu0 0.0
    %1138 = vmatpush1.msra.mxu0 0.0
    %1139 = vmatprep.subr.mxu0 0.0
    %1140 = vmatpush1.msra.mxu0 0.0
    %1141 = vmatprep.subr.mxu0 0.0
    %1142 = vmatpush1.msra.mxu0 0.0
    %1143 = vmatprep.subr.mxu0 0.0
    %1144 = vmatpush1.msra.mxu0 0.0
    %1145 = vmatprep.subr.mxu0 0.0
    %1146 = vmatpush1.msra.mxu0 0.0
    %1147 = vmatprep.subr.mxu0 0.0
    %1148 = vmatpush1.msra.mxu0 0.0
    %1149 = vmatprep.subr.mxu0 0.0
    %1150 = vmatpush1.msra.mxu0 0.0
    %1151 = vmatprep.subr.mxu0 0.0
    %1152 = vmatpush1.msra.mxu0 0.0
    %1153 = vmatprep.subr.mxu0 0.0
    %1154 = vmatpush1.msra.mxu0 0.0
    %1155 = vmatprep.subr.mxu0 0.0
    %1156 = vmatpush1.msra.mxu0 0.0
    %1157 = vmatprep.subr.mxu0 0.0
    %1158 = vmatpush1.msra.mxu0 0.0
    %1159 = vmatprep.subr.mxu0 0.0
    %1160 = vmatpush1.msra.mxu0 0.0
    %1161 = vmatprep.subr.mxu0 0.0
    %1162 = vmatpush1.msra.mxu0 0.0
    %1163 = vmatprep.subr.mxu0 0.0
    %1164 = vmatpush1.msra.mxu0 0.0
    %1165 = vmatprep.subr.mxu0 0.0
    %1166 = vmatpush1.msra.mxu0 0.0
    %1167 = vmatprep.subr.mxu0 0.0
    %1168 = vmatpush1.msra.mxu0 0.0
    %1169 = vmatprep.mubr.f32.mxu0 0.0
    %1170 = vmatmul.mubr.f32.gmra.mrb[0].mxu0 %v1103
    %v1171 = vpop.f32.mrb[0].mxu0
    %v1172 = vadd.f32 0.0, %v1171
    %v1173 = vpop.f32.mrb[0].mxu0
    %1174 = vdwg.mxu0
    %v1176 = vrot.slane %v1172, 1
    %v1177 = vrot.slane %v1172, 2
    %v1180 = vadd.f32 %v103, %v1176
    %v1181 = vadd.f32 %v108, %v1177
    %v1182 = vxor.u32 %v1180, 2147483648
    %v1183 = vxor.u32 %v1181, 2147483648
    %v1184 = vmul.f32 %v1182, 1.442695
    %v1185 = vpow.pop %v1184
    %v1186 = vmul.f32 %v1183, 1.442695
    %v1187 = vpow.pop %v1186
    %v1188 = vadd.f32 %v1185, 1.0
    %v1189 = vadd.f32 %v1187, 1.0
    %v1190 = vrcp.pop %v1188
    %v1191 = vmul.f32 1.0, %v1190
    %v1192 = vrcp.pop %v1189
    %v1193 = vmul.f32 1.0, %v1192
    %v1194 = vadd.f32 %v1172, %v207
    %v1196 = vrot.slane %v1194, 1
    %v1197 = vrot.slane %v1194, 2
    %1198 = vrot.lane.b32.xlu0 %v1196, 118
    %v1199 = vpop.permute.xlu0 %1198
    %1200 = vrot.lane.b32.xlu0 %v1197, 118
    %v1201 = vpop.permute.xlu0 %1200
    %v1204 = vmul.f32 %v1191, %v1199
    %v1205 = vmul.f32 %v1193, %v1201
    %1208 = vrot.lane.b32.xlu0 %v1204, 10
    %v1209 = vpop.permute.xlu0 %1208
    %1210 = vrot.lane.b32.xlu0 %v1205, 10
    %v1211 = vpop.permute.xlu0 %1210
    %v1214 = vadd.f32 %v103, %v1209
    %v1215 = vadd.f32 %v108, %v1211
    %v1216 = vtanh.pop %v1214
    %v1217 = vtanh.pop %v1215
    %v1218 = vsub.f32 1.0, %v1191
    %v1219 = vsub.f32 1.0, %v1193
    %1222 = vrot.lane.b32.xlu0 %v1216, 123
    %v1223 = vpop.permute.xlu0 %1222
    %1224 = vrot.lane.b32.xlu0 %v1217, 123
    %v1225 = vpop.permute.xlu0 %1224
    %v1228 = vmul.f32 %v1218, %v1223
    %v1229 = vmul.f32 %v1219, %v1225
    %v1230 = vrot.slane %v1094, 7
    %v1231 = vrot.slane %v1095, 7
    %v1234 = vmul.f32 %v1191, %v1230
    %v1235 = vmul.f32 %v1193, %v1231
    %v1236 = vadd.f32 %v1228, %v1234
    %v1237 = vadd.f32 %v1229, %v1235
    %v1240 = vrot.slane %v1236, 7
    %v1241 = vrot.slane %v1237, 6
    %v1242 = vsel %vm251, %v1241, %v1240
    %1243 = vrot.lane.b32.xlu0 %v1242, 123
    %v1244 = vpop.permute.xlu0 %1243
    %1245 = vrot.lane.b32.xlu0 %v15, 98
    %v1246 = vpop.permute.xlu0 %1245
    %1247 = vrot.lane.b32.xlu0 %v23, 108
    %v1248 = vpop.permute.xlu0 %1247
    %v1250 = vsel %vm25, %v1244, 0
    %v1252 = vsel %vm32, %v1246, 0
    %1254 = vmatprep.subr.mxu0 0.0
    %1255 = vmatpush1.msra.mxu0 %v1252
    %1256 = vmatprep.subr.mxu0 0.0
    %1257 = vmatpush1.msra.mxu0 0.0
    %1258 = vmatprep.subr.mxu0 0.0
    %1259 = vmatpush1.msra.mxu0 0.0
    %1260 = vmatprep.subr.mxu0 0.0
    %1261 = vmatpush1.msra.mxu0 0.0
    %1262 = vmatprep.subr.mxu0 0.0
    %1263 = vmatpush1.msra.mxu0 0.0
    %1264 = vmatprep.subr.mxu0 0.0
    %1265 = vmatpush1.msra.mxu0 0.0
    %1266 = vmatprep.subr.mxu0 0.0
    %1267 = vmatpush1.msra.mxu0 0.0
    %1268 = vmatprep.subr.mxu0 0.0
    %1269 = vmatpush1.msra.mxu0 0.0
    %1270 = vmatprep.subr.mxu0 0.0
    %1271 = vmatpush1.msra.mxu0 0.0
    %1272 = vmatprep.subr.mxu0 0.0
    %1273 = vmatpush1.msra.mxu0 0.0
    %1274 = vmatprep.subr.mxu0 0.0
    %1275 = vmatpush1.msra.mxu0 0.0
    %1276 = vmatprep.subr.mxu0 0.0
    %1277 = vmatpush1.msra.mxu0 0.0
    %1278 = vmatprep.subr.mxu0 0.0
    %1279 = vmatpush1.msra.mxu0 0.0
    %1280 = vmatprep.subr.mxu0 0.0
    %1281 = vmatpush1.msra.mxu0 0.0
    %1282 = vmatprep.subr.mxu0 0.0
    %1283 = vmatpush1.msra.mxu0 0.0
    %1284 = vmatprep.subr.mxu0 0.0
    %1285 = vmatpush1.msra.mxu0 0.0
    %1286 = vmatprep.subr.mxu0 0.0
    %1287 = vmatpush1.msra.mxu0 0.0
    %1288 = vmatprep.subr.mxu0 0.0
    %1289 = vmatpush1.msra.mxu0 0.0
    %1290 = vmatprep.subr.mxu0 0.0
    %1291 = vmatpush1.msra.mxu0 0.0
    %1292 = vmatprep.subr.mxu0 0.0
    %1293 = vmatpush1.msra.mxu0 0.0
    %1294 = vmatprep.subr.mxu0 0.0
    %1295 = vmatpush1.msra.mxu0 0.0
    %1296 = vmatprep.subr.mxu0 0.0
    %1297 = vmatpush1.msra.mxu0 0.0
    %1298 = vmatprep.subr.mxu0 0.0
    %1299 = vmatpush1.msra.mxu0 0.0
    %1300 = vmatprep.subr.mxu0 0.0
    %1301 = vmatpush1.msra.mxu0 0.0
    %1302 = vmatprep.subr.mxu0 0.0
    %1303 = vmatpush1.msra.mxu0 0.0
    %1304 = vmatprep.subr.mxu0 0.0
    %1305 = vmatpush1.msra.mxu0 0.0
    %1306 = vmatprep.subr.mxu0 0.0
    %1307 = vmatpush1.msra.mxu0 0.0
    %1308 = vmatprep.subr.mxu0 0.0
    %1309 = vmatpush1.msra.mxu0 0.0
    %1310 = vmatprep.subr.mxu0 0.0
    %1311 = vmatpush1.msra.mxu0 0.0
    %1312 = vmatprep.subr.mxu0 0.0
    %1313 = vmatpush1.msra.mxu0 0.0
    %1314 = vmatprep.subr.mxu0 0.0
    %1315 = vmatpush1.msra.mxu0 0.0
    %1316 = vmatprep.subr.mxu0 0.0
    %1317 = vmatpush1.msra.mxu0 0.0
    %1318 = vmatprep.mubr.f32.mxu0 0.0
    %1319 = vmatmul.mubr.f32.gmra.mrb[0].mxu0 %v1250
    %v1320 = vpop.f32.mrb[0].mxu0
    %v1321 = vadd.f32 %v1248, %v1320
    %v1322 = vpop.f32.mrb[0].mxu0
    %1323 = vdwg.mxu0
    %vm1324 = vcmask 9216
    %1325 = vst.msk [vmem:[#allocation2] sm:$0x3] %vm1324, %v1321
    // Predicated region
    $region14: #{tpu_custom_call.1} parent=1 // pred_check
      _
    $region15: #{tpu_custom_call.1} parent=1 // pred_check_branch
      %1327 = sbr.rel (0) target = $region17
    $region16: #{tpu_custom_call.1} parent=1 // pred_region
      %s1329 = ssub.s32 32, 32
      %1330 = vsyncadd [#allocation3], %s1329
      %s1332 = sshll.u32 [#allocation2], 4
      %s1333 = int_to_ptr.vmem [resolvable:$true] %s1332
      %1335 = dma.vmem_to_hbm [thread:$0]  %s1333, 32, %s3, [#allocation3]
    $region17: #{tpu_custom_call.1} parent=1 // pred_fallthru
      _
    // Predicated region
    $region18: #{tpu_custom_call.1} parent=1 // pred_check
      _
    $region19: #{tpu_custom_call.1} parent=1 // pred_check_branch
      %1337 = sbr.rel (0) target = $region21
    $region20: #{tpu_custom_call.1} parent=1 // pred_region
      %1338 = dma.done [#allocation3], 32
    $region21: #{tpu_custom_call.1} parent=1 // pred_fallthru
      _
    %1339 = vsyncpa [#allocation3], 1

</llo_original>
